<compile_context>
chip_gen: v7x
topology: tpu7x:2x2x1
jax: 0.10.0
libtpu: 0.0.40
codegen_flags: <defaults>
</compile_context>

<pallas_src>
import jax
import jax.numpy as jnp
from jax.experimental import pallas as pl
from jax.experimental.pallas import tpu as pltpu


def _round_up(x, m):
    return (x + m - 1) // m * m


def _ffn_kernel(x_ref, w1_ref, w3_ref, w2_ref, o_ref, acc_ref):
    # x_ref:  (tm, D)   bf16   (resident across the hidden axis)
    # w1_ref: (D, th)   bf16   (streamed)
    # w3_ref: (D, th)   bf16   (streamed)
    # w2_ref: (th, D)   bf16   (streamed)
    # o_ref:  (tm, D)          (written once, at the last hidden tile)
    # acc_ref:(tm, D)   f32 scratch, persists across the hidden-tile axis
    h = pl.program_id(1)

    @pl.when(h == 0)
    def _():
        acc_ref[...] = jnp.zeros_like(acc_ref)

    x = x_ref[...]
    h1 = jnp.dot(x, w1_ref[...], preferred_element_type=jnp.float32)
    h3 = jnp.dot(x, w3_ref[...], preferred_element_type=jnp.float32)
    g = h1 * h3                                  # f32 elementwise (VPU)
    act = g * jax.nn.sigmoid(g)                  # SiLU of the product (EUP exp)
    acc_ref[...] += jnp.dot(act.astype(w2_ref.dtype), w2_ref[...],
                            preferred_element_type=jnp.float32)

    @pl.when(h == pl.num_programs(1) - 1)
    def _():
        o_ref[...] = acc_ref[...].astype(o_ref.dtype)


def feed_forward_pallas(x, w1_t, w3_t, w2_t, *, tm=256, th=1024):
    """x: (batch, seq, dim); w1_t/w3_t: (dim, hidden); w2_t: (hidden, dim).

    Weights are stored pre-transposed as (in_features, out_features) so that
    y = x @ W reproduces PyTorch nn.Linear (y = x @ W.T) semantics.
    """
    B, S, D = x.shape
    H = w1_t.shape[1]
    T = B * S
    compute_dtype = jnp.bfloat16

    # Align tiles to the (8, 128) layout constraints and clamp to actual sizes.
    tm = _round_up(min(tm, _round_up(T, 8)), 8)
    th = _round_up(min(th, _round_up(H, 128)), 128)

    # Chip-aware scoped-VMEM limit (v5e/v6e: 128 MiB phys, v7x: 64 MiB).
    try:
        vmem_cap = int(pltpu.get_tpu_info().vmem_capacity_bytes)
    except Exception:
        vmem_cap = 64 * 1024 * 1024
    vmem_limit = int(vmem_cap * 0.80)

    # Shrink the hidden tile if the double-buffered weight slabs + resident
    # buffers would blow the budget.
    def _vmem_bytes(tm_, th_):
        streamed = 2 * (2 * D * th_ + 2 * D * th_ + 2 * th_ * D)   # bf16, x2 buf
        resident = 2 * tm_ * D * 2 + 4 * tm_ * D                   # x(bf16,2buf)+acc
        out_buf = 2 * tm_ * D * x.dtype.itemsize
        return streamed + resident + out_buf
    while th > 128 and _vmem_bytes(tm, th) > vmem_limit:
        th -= 128

    T_pad = _round_up(T, tm)
    H_pad = _round_up(H, th)

    x2 = x.reshape(T, D).astype(compute_dtype)
    if T_pad != T:
        x2 = jnp.pad(x2, ((0, T_pad - T), (0, 0)))
    w1c = w1_t.astype(compute_dtype)
    w3c = w3_t.astype(compute_dtype)
    w2c = w2_t.astype(compute_dtype)
    if H_pad != H:
        w1c = jnp.pad(w1c, ((0, 0), (0, H_pad - H)))
        w3c = jnp.pad(w3c, ((0, 0), (0, H_pad - H)))
        w2c = jnp.pad(w2c, ((0, H_pad - H), (0, 0)))

    grid = (T_pad // tm, H_pad // th)

    flops = 3 * 2 * T_pad * D * H_pad
    bytes_accessed = (x2.size * 2 + (w1c.size + w3c.size + w2c.size) * 2
                      + T_pad * D * x.dtype.itemsize)
    cost = pl.CostEstimate(flops=flops, transcendentals=T_pad * H_pad,
                           bytes_accessed=bytes_accessed)

    out2 = pl.pallas_call(
        _ffn_kernel,
        out_shape=jax.ShapeDtypeStruct((T_pad, D), x.dtype),
        grid_spec=pltpu.PrefetchScalarGridSpec(
            num_scalar_prefetch=0,
            grid=grid,
            in_specs=[
                # x tile: block index invariant along h -> fetched once per i.
                pl.BlockSpec((tm, D), lambda i, h: (i, 0)),
                # streamed weight tiles (auto double-buffered DMA).
                pl.BlockSpec((D, th), lambda i, h: (0, h)),
                pl.BlockSpec((D, th), lambda i, h: (0, h)),
                pl.BlockSpec((th, D), lambda i, h: (h, 0)),
            ],
            out_specs=pl.BlockSpec((tm, D), lambda i, h: (i, 0)),
            scratch_shapes=[pltpu.VMEM((tm, D), jnp.float32)],
        ),
        compiler_params=pltpu.CompilerParams(
            dimension_semantics=("parallel", "arbitrary"),
            vmem_limit_bytes=vmem_limit,
        ),
        cost_estimate=cost,
    )(x2, w1c, w3c, w2c)
    return out2[:T].reshape(B, S, D)


def make_params(key, dim, hidden_dim, dtype=jnp.float32):
    k1, k2, k3 = jax.random.split(key, 3)
    scale_in = 1.0 / jnp.sqrt(dim)
    scale_hid = 1.0 / jnp.sqrt(hidden_dim)
    # Stored transposed: (in_features, out_features)
    w1_t = jax.random.uniform(k1, (dim, hidden_dim), dtype,
                              minval=-scale_in, maxval=scale_in)
    w3_t = jax.random.uniform(k3, (dim, hidden_dim), dtype,
                              minval=-scale_in, maxval=scale_in)
    w2_t = jax.random.uniform(k2, (hidden_dim, dim), dtype,
                              minval=-scale_hid, maxval=scale_hid)
    return w1_t, w3_t, w2_t


def reference_ffn(x2, w1_t, w3_t, w2_t):
    # Emulates the kernel's bf16-input / f32-accumulate matmuls.
    f32 = jnp.float32
    xb = x2.astype(jnp.bfloat16).astype(f32)
    w1b = w1_t.astype(jnp.bfloat16).astype(f32)
    w3b = w3_t.astype(jnp.bfloat16).astype(f32)
    w2b = w2_t.astype(jnp.bfloat16).astype(f32)
    g = (xb @ w1b) * (xb @ w3b)
    act = g * jax.nn.sigmoid(g)
    return act.astype(jnp.bfloat16).astype(f32) @ w2b


if __name__ == "__main__":
    # Small config consistent with FeedForward.__init__:
    # dim=128, hidden_dim=None -> 4*128=512 -> int(2*512/3)=341 -> rounded up
    # to multiple_of=64 -> hidden_dim=384.
    dim = 128
    multiple_of = 64
    hidden_dim = multiple_of * ((int(2 * (4 * dim) / 3) + multiple_of - 1)
                                // multiple_of)  # 384

    batch, seq = 2, 256  # T = 512 tokens -> 2 token tiles of 256 (parallel axis)
    key = jax.random.PRNGKey(0)
    kx, kp = jax.random.split(key)
    x = jax.random.normal(kx, (batch, seq, dim), dtype=jnp.float32)
    w1_t, w3_t, w2_t = make_params(kp, dim, hidden_dim)

    # th=128 exercises the hidden-dim accumulation axis (3 tiles of 128).
    out = feed_forward_pallas(x, w1_t, w3_t, w2_t, tm=256, th=128)
    out = jax.block_until_ready(out)

    ref = reference_ffn(x.reshape(-1, dim), w1_t, w3_t, w2_t).reshape(x.shape)
    assert out.shape == x.shape
    assert jnp.allclose(out, ref, atol=2e-2, rtol=2e-2), "mismatch vs reference"

    # Also exercise the default (large) hidden tile path: single hidden tile.
    out2 = jax.block_until_ready(feed_forward_pallas(x, w1_t, w3_t, w2_t))
    assert jnp.allclose(out2, ref, atol=2e-2, rtol=2e-2), "mismatch (default tiles)"

    print("KERNEL_OK")
</pallas_src>

<mosaic_0001>
module attributes {stable_mosaic.version = 11 : i64} {
  func.func @_ffn_kernel(%arg0: i32, %arg1: i32, %arg2: memref<256x128xbf16, #tpu.memory_space<vmem>>, %arg3: memref<128x128xbf16, #tpu.memory_space<vmem>>, %arg4: memref<128x128xbf16, #tpu.memory_space<vmem>>, %arg5: memref<128x128xbf16, #tpu.memory_space<vmem>>, %arg6: memref<256x128xf32, #tpu.memory_space<vmem>>, %arg7: memref<256x128xf32, #tpu.memory_space<vmem>>) attributes {dimension_semantics = [#tpu.dimension_semantics<parallel>, #tpu.dimension_semantics<arbitrary>], iteration_bounds = array<i64: 2, 3>, scalar_prefetch = 0 : i64, scratch_operands = 1 : i64, tpu.core_type = #tpu.core_type<tc>, window_params = [{transform_indices = @transform_0, window_bounds = array<i64: 256, 128>}, {transform_indices = @transform_1, window_bounds = array<i64: 128, 128>}, {transform_indices = @transform_2, window_bounds = array<i64: 128, 128>}, {transform_indices = @transform_3, window_bounds = array<i64: 128, 128>}, {transform_indices = @transform_4, window_bounds = array<i64: 256, 128>}]} {
    %c0_i32 = arith.constant 0 : i32
    %0 = arith.cmpi eq, %arg1, %c0_i32 : i32
    %1 = arith.extui %0 : i1 to i32
    %c0_i32_0 = arith.constant 0 : i32
    %2 = arith.cmpi ne, %1, %c0_i32_0 : i32
    scf.if %2 {
      %cst_16 = arith.constant 0.000000e+00 : f32
      %24 = vector.broadcast %cst_16 : f32 to vector<256x128xf32>
      %c0_17 = arith.constant 0 : index
      %c0_18 = arith.constant 0 : index
      %25 = vector.load %arg7[%c0_17, %c0_18] : memref<256x128xf32, #tpu.memory_space<vmem>>, vector<256x128xf32>
      tpu.vector_store %arg7[%c0_17, %c0_18], %24 {strides = array<i32>} : memref<256x128xf32, #tpu.memory_space<vmem>>, vector<256x128xf32>,
    } else {
    }
    %c0 = arith.constant 0 : index
    %c0_1 = arith.constant 0 : index
    %3 = vector.load %arg2[%c0, %c0_1] : memref<256x128xbf16, #tpu.memory_space<vmem>>, vector<256x128xbf16>
    %c0_2 = arith.constant 0 : index
    %c0_3 = arith.constant 0 : index
    %4 = vector.load %arg3[%c0_2, %c0_3] : memref<128x128xbf16, #tpu.memory_space<vmem>>, vector<128x128xbf16>
    %cst = arith.constant dense<0.000000e+00> : vector<256x128xf32>
    %5 = tpu.matmul %3, %4, %cst {dimension_numbers = #tpu.dot_dimension_numbers<[1], [0], [0], [1], [0, 0, 1, 1], [], []>} : vector<256x128xbf16>, vector<128x128xbf16>, vector<256x128xf32> -> vector<256x128xf32>
    %c0_4 = arith.constant 0 : index
    %c0_5 = arith.constant 0 : index
    %6 = vector.load %arg4[%c0_4, %c0_5] : memref<128x128xbf16, #tpu.memory_space<vmem>>, vector<128x128xbf16>
    %cst_6 = arith.constant dense<0.000000e+00> : vector<256x128xf32>
    %7 = tpu.matmul %3, %6, %cst_6 {dimension_numbers = #tpu.dot_dimension_numbers<[1], [0], [0], [1], [0, 0, 1, 1], [], []>} : vector<256x128xbf16>, vector<128x128xbf16>, vector<256x128xf32> -> vector<256x128xf32>
    %8 = arith.mulf %5, %7 : vector<256x128xf32>
    %9 = arith.negf %8 : vector<256x128xf32>
    %10 = math.exp %9 : vector<256x128xf32>
    %cst_7 = arith.constant 1.000000e+00 : f32
    %11 = vector.broadcast %cst_7 : f32 to vector<256x128xf32>
    %12 = arith.addf %11, %10 : vector<256x128xf32>
    %13 = arith.divf %11, %12 : vector<256x128xf32>
    %14 = arith.mulf %8, %13 : vector<256x128xf32>
    %c0_8 = arith.constant 0 : index
    %c0_9 = arith.constant 0 : index
    %15 = vector.load %arg7[%c0_8, %c0_9] : memref<256x128xf32, #tpu.memory_space<vmem>>, vector<256x128xf32>
    %16 = arith.truncf %14 : vector<256x128xf32> to vector<256x128xbf16>
    %c0_10 = arith.constant 0 : index
    %c0_11 = arith.constant 0 : index
    %17 = vector.load %arg5[%c0_10, %c0_11] : memref<128x128xbf16, #tpu.memory_space<vmem>>, vector<128x128xbf16>
    %cst_12 = arith.constant dense<0.000000e+00> : vector<256x128xf32>
    %18 = tpu.matmul %16, %17, %cst_12 {dimension_numbers = #tpu.dot_dimension_numbers<[1], [0], [0], [1], [0, 0, 1, 1], [], []>} : vector<256x128xbf16>, vector<128x128xbf16>, vector<256x128xf32> -> vector<256x128xf32>
    %19 = arith.addf %15, %18 : vector<256x128xf32>
    %c0_13 = arith.constant 0 : index
    %c0_14 = arith.constant 0 : index
    %20 = vector.load %arg7[%c0_13, %c0_14] : memref<256x128xf32, #tpu.memory_space<vmem>>, vector<256x128xf32>
    tpu.vector_store %arg7[%c0_13, %c0_14], %19 {strides = array<i32>} : memref<256x128xf32, #tpu.memory_space<vmem>>, vector<256x128xf32>,
    %c2_i32 = arith.constant 2 : i32
    %21 = arith.cmpi eq, %arg1, %c2_i32 : i32
    %22 = arith.extui %21 : i1 to i32
    %c0_i32_15 = arith.constant 0 : i32
    %23 = arith.cmpi ne, %22, %c0_i32_15 : i32
    scf.if %23 {
      %c0_16 = arith.constant 0 : index
      %c0_17 = arith.constant 0 : index
      %24 = vector.load %arg7[%c0_16, %c0_17] : memref<256x128xf32, #tpu.memory_space<vmem>>, vector<256x128xf32>
      %c0_18 = arith.constant 0 : index
      %c0_19 = arith.constant 0 : index
      %25 = vector.load %arg6[%c0_18, %c0_19] : memref<256x128xf32, #tpu.memory_space<vmem>>, vector<256x128xf32>
      tpu.vector_store %arg6[%c0_18, %c0_19], %24 {strides = array<i32>} : memref<256x128xf32, #tpu.memory_space<vmem>>, vector<256x128xf32>,
    } else {
    }
    return
  }
  func.func @transform_0(%arg0: i32, %arg1: i32) -> (i32, i32) {
    %c0_i32 = arith.constant 0 : i32
    %c0_i32_0 = arith.constant 0 : i32
    return %arg0, %c0_i32 : i32, i32
  }
  func.func @transform_1(%arg0: i32, %arg1: i32) -> (i32, i32) {
    %c0_i32 = arith.constant 0 : i32
    %c0_i32_0 = arith.constant 0 : i32
    return %c0_i32, %arg1 : i32, i32
  }
  func.func @transform_2(%arg0: i32, %arg1: i32) -> (i32, i32) {
    %c0_i32 = arith.constant 0 : i32
    %c0_i32_0 = arith.constant 0 : i32
    return %c0_i32, %arg1 : i32, i32
  }
  func.func @transform_3(%arg0: i32, %arg1: i32) -> (i32, i32) {
    %c0_i32 = arith.constant 0 : i32
    %c0_i32_0 = arith.constant 0 : i32
    return %arg1, %c0_i32 : i32, i32
  }
  func.func @transform_4(%arg0: i32, %arg1: i32) -> (i32, i32) {
    %c0_i32 = arith.constant 0 : i32
    %c0_i32_0 = arith.constant 0 : i32
    return %arg0, %c0_i32 : i32, i32
  }
}

</mosaic_0001>

<llo_original>
// kernel: tpu_custom_call.1
$region0: #{tpu_custom_call.1}
  #allocation0 [shape = 'u32[]', space=smem, size = 0x4, offset = 0x4, fixed_abs, tag = 'smem constant byte address 0x4 - core index']
  #allocation1 [shape = 'u32[144,128]{1,0:T(1,128)}', space=vmem, size = 0x12000, scoped, tag = 'internal scratch']
  #allocation2 [shape = 'f32[256,128]{1,0:T(8,128)}', space=vmem, size = 0x20000, scoped, tag = 'scratch operand']
  %s0 = inlined_call_operand.hbm [shape: bf16[512,128], index: 0, kind: input, shape index: {}]
  %s1 = inlined_call_operand.hbm [shape: bf16[128,384], index: 1, kind: input, shape index: {}]
  %s2 = inlined_call_operand.hbm [shape: bf16[128,384], index: 2, kind: input, shape index: {}]
  %s3 = inlined_call_operand.hbm [shape: bf16[384,128], index: 3, kind: input, shape index: {}]
  %s4 = inlined_call_operand.hbm [shape: f32[512,128], index: 4, kind: output, shape index: {}]
  %s5 = sld [smem:[#allocation0]]
  $region73: #{tpu_custom_call.1} parent=0
    _
  %s7 = ssub.s32 1, %s5
  %s8 = scalar_select 0, %s7, %s5
  $region1: #{tpu_custom_call.1} parent=0
    #allocation3 [shape = 'u8[131072]{0}', space=vmem, size = 0x20000, scoped, tag = 'input window, operand 0']
    #allocation4 [shape = 's32[2]{0}', space=sflag, size = 0x8, scoped, tag = 'scoped memory for tpu_custom_call.1']
    #allocation5 [shape = 's32[2]{0}', space=sflag, size = 0x8, scoped, tag = 'scoped memory for tpu_custom_call.1']
    #allocation6 [shape = 'u8[65536]{0}', space=vmem, size = 0x10000, scoped, tag = 'input window, operand 1']
    #allocation7 [shape = 's32[2]{0}', space=sflag, size = 0x8, scoped, tag = 'scoped memory for tpu_custom_call.1']
    #allocation8 [shape = 'u8[65536]{0}', space=vmem, size = 0x10000, scoped, tag = 'input window, operand 2']
    #allocation9 [shape = 'u8[65536]{0}', space=vmem, size = 0x10000, scoped, tag = 'input window, operand 3']
    #allocation10 [shape = 's32[2]{0}', space=sflag, size = 0x8, scoped, tag = 'scoped memory for tpu_custom_call.1']
    #allocation11 [shape = 'u8[262144]{0}', space=vmem, size = 0x40000, scoped, tag = 'output window, operand 0']
    %9 = vsyncpa [#allocation4], 0
    %s10 = scalar_lea.sflag [#allocation4], 1
    %11 = vsyncpa %s10, 0
    %12 = vsyncpa [#allocation7], 0
    %s13 = scalar_lea.sflag [#allocation7], 1
    %14 = vsyncpa %s13, 0
    %15 = vsyncpa [#allocation10], 0
    %s16 = scalar_lea.sflag [#allocation10], 1
    %17 = vsyncpa %s16, 0
    %18 = vsyncpa [#allocation5], 0
    %s19 = scalar_lea.sflag [#allocation5], 1
    %20 = vsyncpa %s19, 0
    loop: start=0, step=1, limit=8
    $region2: #{tpu_custom_call.1} parent=1 // loop_pre_header
      _
    $region3: #{tpu_custom_call.1} parent=1 // loop_header
      %s22 = sphi 0, %s26
      %p23 = scmp.ge.s32.totalorder %s22, 8
      %s29 = sphi 0, %s41
      %s30 = sphi 0, %s37
      %s31 = sphi 0, %s29
      %s32 = sphi 0, %s30
      %s33 = sphi 0, %s31
      %s34 = sphi 0, %s32
      %s44 = sphi 0, %s46
      %s47 = sphi 0, %s44
      %s48 = sphi 0, %s47
      %s64 = sphi 0, %s48
      %s70 = sphi 0, %s72
      %s73 = sphi 0, %s70
      %s74 = sphi 0, %s73
      %s90 = sphi 0, %s74
      %s96 = sphi 0, %s98
      %s99 = sphi 0, %s96
      %s100 = sphi 0, %s99
      %s116 = sphi 0, %s100
      %s122 = sphi 0, %s124
      %s125 = sphi 0, %s122
      %s126 = sphi 0, %s125
      %s142 = sphi 0, %s126
      %s148 = sphi 0, %s150
      %s151 = sphi 0, %s148
      %s152 = sphi 0, %s151
      %s168 = sphi 0, %s152
    $region4: #{tpu_custom_call.1} parent=1 // loop_header_branch
      %25 = sbr.rel (%p23) target = $region8
    $region5: #{tpu_custom_call.1} parent=1 // loop_body
      %s27 = ssub.s32 %s22, 1
      %s28 = ssub.s32 %s22, 2
      %s35 = sadd.s32 1, %s30
      %p36 = scmp.ge.s32.totalorder %s35, 3
      %s37 = scalar_select %p36, 0, %s35
      %s38 = sadd.s32 1, %s29
      %s39 = scalar_select %p36, %s38, %s29
      %p40 = scmp.ge.s32.totalorder %s39, 2
      %s41 = scalar_select %p40, 0, %s39
      %s42 = ssub.s32 %s29, %s41
      %p43 = scmp.eq.s32.totalorder %s42, 0
      %s45 = sadd.s32 %s44, 1
      %s46 = scalar_select %p43, %s44, %s45
      %p49 = pneg %p43
      %p50 = scmp.eq.s32.totalorder %s22, 5
      %p51 = por %p49, %p50
      %p52 = scmp.ne.s32.totalorder %s44, %s47
      %p53 = scmp.eq.s32.totalorder %s22, 0
      %p54 = por %p52, %p53
      %p55 = scmp.ne.s32.totalorder %s44, %s47
      %p56 = scmp.eq.s32.totalorder %s27, 5
      %p57 = por %p55, %p56
      %p58 = scmp.ne.s32.totalorder %s47, %s48
      %p59 = scmp.eq.s32.totalorder %s27, 0
      %p60 = por %p58, %p59
      %p61 = scmp.ne.s32.totalorder %s47, %s48
      %p62 = scmp.eq.s32.totalorder %s28, 5
      %p63 = por %p61, %p62
      %p65 = scmp.ne.s32.totalorder %s48, %s64
      %p66 = scmp.eq.s32.totalorder %s28, 0
      %p67 = por %p65, %p66
      %s68 = ssub.s32 %s30, %s37
      %p69 = scmp.eq.s32.totalorder %s68, 0
      %s71 = sadd.s32 %s70, 1
      %s72 = scalar_select %p69, %s70, %s71
      %p75 = pneg %p69
      %p76 = scmp.eq.s32.totalorder %s22, 5
      %p77 = por %p75, %p76
      %p78 = scmp.ne.s32.totalorder %s70, %s73
      %p79 = scmp.eq.s32.totalorder %s22, 0
      %p80 = por %p78, %p79
      %p81 = scmp.ne.s32.totalorder %s70, %s73
      %p82 = scmp.eq.s32.totalorder %s27, 5
      %p83 = por %p81, %p82
      %p84 = scmp.ne.s32.totalorder %s73, %s74
      %p85 = scmp.eq.s32.totalorder %s27, 0
      %p86 = por %p84, %p85
      %p87 = scmp.ne.s32.totalorder %s73, %s74
      %p88 = scmp.eq.s32.totalorder %s28, 5
      %p89 = por %p87, %p88
      %p91 = scmp.ne.s32.totalorder %s74, %s90
      %p92 = scmp.eq.s32.totalorder %s28, 0
      %p93 = por %p91, %p92
      %s94 = ssub.s32 %s30, %s37
      %p95 = scmp.eq.s32.totalorder %s94, 0
      %s97 = sadd.s32 %s96, 1
      %s98 = scalar_select %p95, %s96, %s97
      %p101 = pneg %p95
      %p102 = scmp.eq.s32.totalorder %s22, 5
      %p103 = por %p101, %p102
      %p104 = scmp.ne.s32.totalorder %s96, %s99
      %p105 = scmp.eq.s32.totalorder %s22, 0
      %p106 = por %p104, %p105
      %p107 = scmp.ne.s32.totalorder %s96, %s99
      %p108 = scmp.eq.s32.totalorder %s27, 5
      %p109 = por %p107, %p108
      %p110 = scmp.ne.s32.totalorder %s99, %s100
      %p111 = scmp.eq.s32.totalorder %s27, 0
      %p112 = por %p110, %p111
      %p113 = scmp.ne.s32.totalorder %s99, %s100
      %p114 = scmp.eq.s32.totalorder %s28, 5
      %p115 = por %p113, %p114
      %p117 = scmp.ne.s32.totalorder %s100, %s116
      %p118 = scmp.eq.s32.totalorder %s28, 0
      %p119 = por %p117, %p118
      %s120 = ssub.s32 %s30, %s37
      %p121 = scmp.eq.s32.totalorder %s120, 0
      %s123 = sadd.s32 %s122, 1
      %s124 = scalar_select %p121, %s122, %s123
      %p127 = pneg %p121
      %p128 = scmp.eq.s32.totalorder %s22, 5
      %p129 = por %p127, %p128
      %p130 = scmp.ne.s32.totalorder %s122, %s125
      %p131 = scmp.eq.s32.totalorder %s22, 0
      %p132 = por %p130, %p131
      %p133 = scmp.ne.s32.totalorder %s122, %s125
      %p134 = scmp.eq.s32.totalorder %s27, 5
      %p135 = por %p133, %p134
      %p136 = scmp.ne.s32.totalorder %s125, %s126
      %p137 = scmp.eq.s32.totalorder %s27, 0
      %p138 = por %p136, %p137
      %p139 = scmp.ne.s32.totalorder %s125, %s126
      %p140 = scmp.eq.s32.totalorder %s28, 5
      %p141 = por %p139, %p140
      %p143 = scmp.ne.s32.totalorder %s126, %s142
      %p144 = scmp.eq.s32.totalorder %s28, 0
      %p145 = por %p143, %p144
      %s146 = ssub.s32 %s29, %s41
      %p147 = scmp.eq.s32.totalorder %s146, 0
      %s149 = sadd.s32 %s148, 1
      %s150 = scalar_select %p147, %s148, %s149
      %p153 = pneg %p147
      %p154 = scmp.eq.s32.totalorder %s22, 5
      %p155 = por %p153, %p154
      %p156 = scmp.ne.s32.totalorder %s148, %s151
      %p157 = scmp.eq.s32.totalorder %s22, 0
      %p158 = por %p156, %p157
      %p159 = scmp.ne.s32.totalorder %s148, %s151
      %p160 = scmp.eq.s32.totalorder %s27, 5
      %p161 = por %p159, %p160
      %p162 = scmp.ne.s32.totalorder %s151, %s152
      %p163 = scmp.eq.s32.totalorder %s27, 0
      %p164 = por %p162, %p163
      %p165 = scmp.ne.s32.totalorder %s151, %s152
      %p166 = scmp.eq.s32.totalorder %s28, 5
      %p167 = por %p165, %p166
      %p169 = scmp.ne.s32.totalorder %s152, %s168
      %p170 = scmp.eq.s32.totalorder %s28, 0
      %p171 = por %p169, %p170
      %p172 = scmp.le.s32.totalorder 1, %s22
      %p173 = scmp.lt.s32.totalorder %s22, 7
      %p174 = pnand %p172, %p173
      %p175 = pneg %p174
      // Predicated region
      $region9: #{tpu_custom_call.1} parent=5 // pred_check
        _
      $region10: #{tpu_custom_call.1} parent=5 // pred_check_branch
        %177 = sbr.rel (%p174) target = $region12
      $region11: #{tpu_custom_call.1} parent=5 // pred_region
        %s178 = ssub.s32 %s22, 1
      $region12: #{tpu_custom_call.1} parent=5 // pred_fallthru
        _
      %p179 = scmp.lt.s32.totalorder %s22, 6
      // Predicated region
      $region13: #{tpu_custom_call.1} parent=5 // pred_check
        %p180 = pneg %p179
      $region14: #{tpu_custom_call.1} parent=5 // pred_check_branch
        %182 = sbr.rel (%p180) target = $region16
      $region15: #{tpu_custom_call.1} parent=5 // pred_region
        // Predicated region
        $region17: #{tpu_custom_call.1} parent=15 // pred_check
          %p183 = pneg %p54
        $region18: #{tpu_custom_call.1} parent=15 // pred_check_branch
          %185 = sbr.rel (%p183) target = $region20
        $region19: #{tpu_custom_call.1} parent=15 // pred_region
          %s186 = sand.u32 %s44, 1
          %s187 = scalar_lea.sflag [#allocation4], %s186
          %s188 = sand.u32 %s44, 1
          %s189 = smul.addr %s188, 128
          %s190 = scalar_lea.vmem [#allocation3], %s189
          %s191 = smul.u32 32, %s29
          %s193 = ssub.s32 2048, 2048
          %194 = vsyncadd %s187, %s193
          %s195 = smul.addr %s191, 64
          %s196 = scalar_lea.hbm %s0, %s195
          %s197 = sshll.u32 %s190, 4
          %s198 = int_to_ptr.vmem [resolvable:$true] %s197
          %203 = dma.hbm_to_vmem [thread:$0]  %s196, 2048, %s198, %s187, 64, 64, 4
        $region20: #{tpu_custom_call.1} parent=15 // pred_fallthru
          _
        // Predicated region
        $region21: #{tpu_custom_call.1} parent=15 // pred_check
          %p204 = pneg %p80
        $region22: #{tpu_custom_call.1} parent=15 // pred_check_branch
          %206 = sbr.rel (%p204) target = $region24
        $region23: #{tpu_custom_call.1} parent=15 // pred_region
          %s207 = sand.u32 %s22, 1
          %s208 = scalar_lea.sflag [#allocation7], %s207
          %s209 = sand.u32 %s70, 1
          %s210 = smul.addr %s209, 64
          %s211 = scalar_lea.vmem [#allocation6], %s210
          %s213 = ssub.s32 1024, 1024
          %214 = vsyncadd %s208, %s213
          %s215 = smul.addr %s30, 64
          %s216 = scalar_lea.hbm %s1, %s215
          %s217 = sshll.u32 %s211, 4
          %s218 = int_to_ptr.vmem [resolvable:$true] %s217
          %223 = dma.hbm_to_vmem [thread:$0]  %s216, 1024, %s218, %s208, 192, 64, 4
        $region24: #{tpu_custom_call.1} parent=15 // pred_fallthru
          _
        // Predicated region
        $region25: #{tpu_custom_call.1} parent=15 // pred_check
          %p224 = pneg %p106
        $region26: #{tpu_custom_call.1} parent=15 // pred_check_branch
          %226 = sbr.rel (%p224) target = $region28
        $region27: #{tpu_custom_call.1} parent=15 // pred_region
          %s227 = sand.u32 %s22, 1
          %s228 = scalar_lea.sflag [#allocation7], %s227
          %s229 = sand.u32 %s96, 1
          %s230 = smul.addr %s229, 64
          %s231 = scalar_lea.vmem [#allocation8], %s230
          %s233 = ssub.s32 1024, 1024
          %234 = vsyncadd %s228, %s233
          %s235 = smul.addr %s30, 64
          %s236 = scalar_lea.hbm %s2, %s235
          %s237 = sshll.u32 %s231, 4
          %s238 = int_to_ptr.vmem [resolvable:$true] %s237
          %243 = dma.hbm_to_vmem [thread:$0]  %s236, 1024, %s238, %s228, 192, 64, 4
        $region28: #{tpu_custom_call.1} parent=15 // pred_fallthru
          _
        // Predicated region
        $region29: #{tpu_custom_call.1} parent=15 // pred_check
          %p244 = pneg %p132
        $region30: #{tpu_custom_call.1} parent=15 // pred_check_branch
          %246 = sbr.rel (%p244) target = $region32
        $region31: #{tpu_custom_call.1} parent=15 // pred_region
          %s247 = sand.u32 %s122, 1
          %s248 = scalar_lea.sflag [#allocation10], %s247
          %s249 = sand.u32 %s122, 1
          %s250 = smul.addr %s249, 64
          %s251 = scalar_lea.vmem [#allocation9], %s250
          %s252 = smul.u32 16, %s30
          %s254 = ssub.s32 1024, 1024
          %255 = vsyncadd %s248, %s254
          %s256 = smul.addr %s252, 64
          %s257 = scalar_lea.hbm %s3, %s256
          %s258 = sshll.u32 %s251, 4
          %s259 = int_to_ptr.vmem [resolvable:$true] %s258
          %264 = dma.hbm_to_vmem [thread:$0]  %s257, 1024, %s259, %s248, 64, 64, 4
        $region32: #{tpu_custom_call.1} parent=15 // pred_fallthru
          _
      $region16: #{tpu_custom_call.1} parent=5 // pred_fallthru
        _
      %p265 = scmp.le.s32.totalorder 1, %s22
      %p266 = scmp.lt.s32.totalorder %s22, 7
      %p267 = pnand %p265, %p266
      %p268 = pneg %p267
      // Predicated region
      $region33: #{tpu_custom_call.1} parent=5 // pred_check
        _
      $region34: #{tpu_custom_call.1} parent=5 // pred_check_branch
        %270 = sbr.rel (%p267) target = $region36
      $region35: #{tpu_custom_call.1} parent=5 // pred_region
        %s271 = ssub.s32 %s22, 1
        %s272 = sand.u32 %s47, 1
        %s273 = scalar_lea.sflag [#allocation4], %s272
        %s274 = sand.u32 %s47, 1
        %s275 = smul.addr %s274, 128
        %s276 = scalar_lea.vmem [#allocation3], %s275
        // Predicated region
        $region37: #{tpu_custom_call.1} parent=35 // pred_check
          %p277 = pneg %p60
        $region38: #{tpu_custom_call.1} parent=35 // pred_check_branch
          %279 = sbr.rel (%p277) target = $region40
        $region39: #{tpu_custom_call.1} parent=35 // pred_region
          %280 = dma.done %s273, 2048
        $region40: #{tpu_custom_call.1} parent=35 // pred_fallthru
          _
        %s281 = sand.u32 %s27, 1
        %s282 = scalar_lea.sflag [#allocation7], %s281
        %s283 = sand.u32 %s73, 1
        %s284 = smul.addr %s283, 64
        %s285 = scalar_lea.vmem [#allocation6], %s284
        // Predicated region
        $region41: #{tpu_custom_call.1} parent=35 // pred_check
          %p286 = pneg %p86
        $region42: #{tpu_custom_call.1} parent=35 // pred_check_branch
          %288 = sbr.rel (%p286) target = $region44
        $region43: #{tpu_custom_call.1} parent=35 // pred_region
          %289 = dma.done %s282, 1024
        $region44: #{tpu_custom_call.1} parent=35 // pred_fallthru
          _
        %s290 = sand.u32 %s27, 1
        %s291 = scalar_lea.sflag [#allocation7], %s290
        %s292 = sand.u32 %s99, 1
        %s293 = smul.addr %s292, 64
        %s294 = scalar_lea.vmem [#allocation8], %s293
        // Predicated region
        $region45: #{tpu_custom_call.1} parent=35 // pred_check
          %p295 = pneg %p112
        $region46: #{tpu_custom_call.1} parent=35 // pred_check_branch
          %297 = sbr.rel (%p295) target = $region48
        $region47: #{tpu_custom_call.1} parent=35 // pred_region
          %298 = dma.done %s291, 1024
        $region48: #{tpu_custom_call.1} parent=35 // pred_fallthru
          _
        %s299 = sand.u32 %s125, 1
        %s300 = scalar_lea.sflag [#allocation10], %s299
        %s301 = sand.u32 %s125, 1
        %s302 = smul.addr %s301, 64
        %s303 = scalar_lea.vmem [#allocation9], %s302
        // Predicated region
        $region49: #{tpu_custom_call.1} parent=35 // pred_check
          %p304 = pneg %p138
        $region50: #{tpu_custom_call.1} parent=35 // pred_check_branch
          %306 = sbr.rel (%p304) target = $region52
        $region51: #{tpu_custom_call.1} parent=35 // pred_region
          %307 = dma.done %s300, 1024
        $region52: #{tpu_custom_call.1} parent=35 // pred_fallthru
          _
        %s308 = sand.u32 %s47, 1
        %s309 = scalar_lea.sflag [#allocation4], %s308
        %s310 = sand.u32 %s47, 1
        %s311 = smul.addr %s310, 128
        %s312 = scalar_lea.vmem [#allocation3], %s311
        %p313 = pneg %p60
        %p314 = pneg %p57
        %s315 = sand.u32 %s27, 1
        %s316 = scalar_lea.sflag [#allocation7], %s315
        %s317 = sand.u32 %s73, 1
        %s318 = smul.addr %s317, 64
        %s319 = scalar_lea.vmem [#allocation6], %s318
        %p320 = pneg %p86
        %p321 = pneg %p83
        %s322 = sand.u32 %s27, 1
        %s323 = scalar_lea.sflag [#allocation7], %s322
        %s324 = sand.u32 %s99, 1
        %s325 = smul.addr %s324, 64
        %s326 = scalar_lea.vmem [#allocation8], %s325
        %p327 = pneg %p112
        %p328 = pneg %p109
        %s329 = sand.u32 %s125, 1
        %s330 = scalar_lea.sflag [#allocation10], %s329
        %s331 = sand.u32 %s125, 1
        %s332 = smul.addr %s331, 64
        %s333 = scalar_lea.vmem [#allocation9], %s332
        %p334 = pneg %p138
        %p335 = pneg %p135
        %p336 = pneg %p164
        %p337 = pneg %p161
        %s338 = sand.u32 %s151, 1
        %s339 = scalar_lea.sflag [#allocation5], %s338
        %s340 = sand.u32 %s151, 1
        %s341 = smul.addr %s340, 256
        %s342 = scalar_lea.vmem [#allocation11], %s341
        %s343 = smul.u32 32, %s31
        %s344 = smul.u32 16, %s32
        %s345 = smul.u32 32, %s31
        %p347 = scmp.eq.s32.totalorder %s32, 0
        // Predicated region
        $region53: #{tpu_custom_call.1} parent=35 // pred_check
          %p348 = pneg %p347
        $region54: #{tpu_custom_call.1} parent=35 // pred_check_branch
          %350 = sbr.rel (%p348) target = $region56
        $region55: #{tpu_custom_call.1} parent=35 // pred_region
          %351 = vst [vmem:[#allocation2] sm:$0xff] 0.0
          %352 = vst [vmem:[#allocation2 + $0x8] sm:$0xff] 0.0
          %353 = vst [vmem:[#allocation2 + $0x10] sm:$0xff] 0.0
          %354 = vst [vmem:[#allocation2 + $0x18] sm:$0xff] 0.0
          %355 = vst [vmem:[#allocation2 + $0x20] sm:$0xff] 0.0
          %356 = vst [vmem:[#allocation2 + $0x28] sm:$0xff] 0.0
          %357 = vst [vmem:[#allocation2 + $0x30] sm:$0xff] 0.0
          %358 = vst [vmem:[#allocation2 + $0x38] sm:$0xff] 0.0
          %359 = vst [vmem:[#allocation2 + $0x40] sm:$0xff] 0.0
          %360 = vst [vmem:[#allocation2 + $0x48] sm:$0xff] 0.0
          %361 = vst [vmem:[#allocation2 + $0x50] sm:$0xff] 0.0
          %362 = vst [vmem:[#allocation2 + $0x58] sm:$0xff] 0.0
          %363 = vst [vmem:[#allocation2 + $0x60] sm:$0xff] 0.0
          %364 = vst [vmem:[#allocation2 + $0x68] sm:$0xff] 0.0
          %365 = vst [vmem:[#allocation2 + $0x70] sm:$0xff] 0.0
          %366 = vst [vmem:[#allocation2 + $0x78] sm:$0xff] 0.0
          %367 = vst [vmem:[#allocation2 + $0x80] sm:$0xff] 0.0
          %368 = vst [vmem:[#allocation2 + $0x88] sm:$0xff] 0.0
          %369 = vst [vmem:[#allocation2 + $0x90] sm:$0xff] 0.0
          %370 = vst [vmem:[#allocation2 + $0x98] sm:$0xff] 0.0
          %371 = vst [vmem:[#allocation2 + $0xa0] sm:$0xff] 0.0
          %372 = vst [vmem:[#allocation2 + $0xa8] sm:$0xff] 0.0
          %373 = vst [vmem:[#allocation2 + $0xb0] sm:$0xff] 0.0
          %374 = vst [vmem:[#allocation2 + $0xb8] sm:$0xff] 0.0
          %375 = vst [vmem:[#allocation2 + $0xc0] sm:$0xff] 0.0
          %376 = vst [vmem:[#allocation2 + $0xc8] sm:$0xff] 0.0
          %377 = vst [vmem:[#allocation2 + $0xd0] sm:$0xff] 0.0
          %378 = vst [vmem:[#allocation2 + $0xd8] sm:$0xff] 0.0
          %379 = vst [vmem:[#allocation2 + $0xe0] sm:$0xff] 0.0
          %380 = vst [vmem:[#allocation2 + $0xe8] sm:$0xff] 0.0
          %381 = vst [vmem:[#allocation2 + $0xf0] sm:$0xff] 0.0
          %382 = vst [vmem:[#allocation2 + $0xf8] sm:$0xff] 0.0
        $region56: #{tpu_custom_call.1} parent=35 // pred_fallthru
          _
        %v383 = vld [vmem:[%s276] sm:$0xf]
        %v384 = vld [vmem:[%s276 + $0x4] sm:$0xf]
        %v385 = vld [vmem:[%s276 + $0x8] sm:$0xf]
        %v386 = vld [vmem:[%s276 + $0xc] sm:$0xf]
        %v387 = vld [vmem:[%s276 + $0x10] sm:$0xf]
        %v388 = vld [vmem:[%s276 + $0x14] sm:$0xf]
        %v389 = vld [vmem:[%s276 + $0x18] sm:$0xf]
        %v390 = vld [vmem:[%s276 + $0x1c] sm:$0xf]
        %v391 = vld [vmem:[%s276 + $0x20] sm:$0xf]
        %v392 = vld [vmem:[%s276 + $0x24] sm:$0xf]
        %v393 = vld [vmem:[%s276 + $0x28] sm:$0xf]
        %v394 = vld [vmem:[%s276 + $0x2c] sm:$0xf]
        %v395 = vld [vmem:[%s276 + $0x30] sm:$0xf]
        %v396 = vld [vmem:[%s276 + $0x34] sm:$0xf]
        %v397 = vld [vmem:[%s276 + $0x38] sm:$0xf]
        %v398 = vld [vmem:[%s276 + $0x3c] sm:$0xf]
        %v399 = vld [vmem:[%s276 + $0x40] sm:$0xf]
        %v400 = vld [vmem:[%s276 + $0x44] sm:$0xf]
        %v401 = vld [vmem:[%s276 + $0x48] sm:$0xf]
        %v402 = vld [vmem:[%s276 + $0x4c] sm:$0xf]
        %v403 = vld [vmem:[%s276 + $0x50] sm:$0xf]
        %v404 = vld [vmem:[%s276 + $0x54] sm:$0xf]
        %v405 = vld [vmem:[%s276 + $0x58] sm:$0xf]
        %v406 = vld [vmem:[%s276 + $0x5c] sm:$0xf]
        %v407 = vld [vmem:[%s276 + $0x60] sm:$0xf]
        %v408 = vld [vmem:[%s276 + $0x64] sm:$0xf]
        %v409 = vld [vmem:[%s276 + $0x68] sm:$0xf]
        %v410 = vld [vmem:[%s276 + $0x6c] sm:$0xf]
        %v411 = vld [vmem:[%s276 + $0x70] sm:$0xf]
        %v412 = vld [vmem:[%s276 + $0x74] sm:$0xf]
        %v413 = vld [vmem:[%s276 + $0x78] sm:$0xf]
        %v414 = vld [vmem:[%s276 + $0x7c] sm:$0xf]
        %v415 = vld [vmem:[%s285] sm:$0xf]
        %v416 = vld [vmem:[%s285 + $0x4] sm:$0xf]
        %v417 = vld [vmem:[%s285 + $0x8] sm:$0xf]
        %v418 = vld [vmem:[%s285 + $0xc] sm:$0xf]
        %v419 = vld [vmem:[%s285 + $0x10] sm:$0xf]
        %v420 = vld [vmem:[%s285 + $0x14] sm:$0xf]
        %v421 = vld [vmem:[%s285 + $0x18] sm:$0xf]
        %v422 = vld [vmem:[%s285 + $0x1c] sm:$0xf]
        %v423 = vld [vmem:[%s285 + $0x20] sm:$0xf]
        %v424 = vld [vmem:[%s285 + $0x24] sm:$0xf]
        %v425 = vld [vmem:[%s285 + $0x28] sm:$0xf]
        %v426 = vld [vmem:[%s285 + $0x2c] sm:$0xf]
        %v427 = vld [vmem:[%s285 + $0x30] sm:$0xf]
        %v428 = vld [vmem:[%s285 + $0x34] sm:$0xf]
        %v429 = vld [vmem:[%s285 + $0x38] sm:$0xf]
        %v430 = vld [vmem:[%s285 + $0x3c] sm:$0xf]
        %v463 = vunpack.c.l.b16 %v383
        %v464 = vunpack.c.l.b16 %v384
        %v465 = vunpack.c.l.b16 %v385
        %v466 = vunpack.c.l.b16 %v386
        %v467 = vunpack.c.l.b16 %v387
        %v468 = vunpack.c.l.b16 %v388
        %v469 = vunpack.c.l.b16 %v389
        %v470 = vunpack.c.l.b16 %v390
        %v471 = vunpack.c.l.b16 %v391
        %v472 = vunpack.c.l.b16 %v392
        %v473 = vunpack.c.l.b16 %v393
        %v474 = vunpack.c.l.b16 %v394
        %v475 = vunpack.c.l.b16 %v395
        %v476 = vunpack.c.l.b16 %v396
        %v477 = vunpack.c.l.b16 %v397
        %v478 = vunpack.c.l.b16 %v398
        %v479 = vunpack.c.l.b16 %v399
        %v480 = vunpack.c.l.b16 %v400
        %v481 = vunpack.c.l.b16 %v401
        %v482 = vunpack.c.l.b16 %v402
        %v483 = vunpack.c.l.b16 %v403
        %v484 = vunpack.c.l.b16 %v404
        %v485 = vunpack.c.l.b16 %v405
        %v486 = vunpack.c.l.b16 %v406
        %v487 = vunpack.c.l.b16 %v407
        %v488 = vunpack.c.l.b16 %v408
        %v489 = vunpack.c.l.b16 %v409
        %v490 = vunpack.c.l.b16 %v410
        %v491 = vunpack.c.l.b16 %v411
        %v492 = vunpack.c.l.b16 %v412
        %v493 = vunpack.c.l.b16 %v413
        %v494 = vunpack.c.l.b16 %v414
        %v495 = vpack.c.b16 %v464, %v463
        %v496 = vpack.c.b16 %v466, %v465
        %v497 = vpack.c.b16 %v468, %v467
        %v498 = vpack.c.b16 %v470, %v469
        %v499 = vpack.c.b16 %v472, %v471
        %v500 = vpack.c.b16 %v474, %v473
        %v501 = vpack.c.b16 %v476, %v475
        %v502 = vpack.c.b16 %v478, %v477
        %v503 = vpack.c.b16 %v480, %v479
        %v504 = vpack.c.b16 %v482, %v481
        %v505 = vpack.c.b16 %v484, %v483
        %v506 = vpack.c.b16 %v486, %v485
        %v507 = vpack.c.b16 %v488, %v487
        %v508 = vpack.c.b16 %v490, %v489
        %v509 = vpack.c.b16 %v492, %v491
        %v510 = vpack.c.b16 %v494, %v493
        %v543 = vunpack.c.l.b16 %v415
        %v544 = vunpack.c.l.b16 %v416
        %v545 = vunpack.c.l.b16 %v417
        %v546 = vunpack.c.l.b16 %v418
        %v547 = vunpack.c.l.b16 %v419
        %v548 = vunpack.c.l.b16 %v420
        %v549 = vunpack.c.l.b16 %v421
        %v550 = vunpack.c.l.b16 %v422
        %v551 = vunpack.c.l.b16 %v423
        %v552 = vunpack.c.l.b16 %v424
        %v553 = vunpack.c.l.b16 %v425
        %v554 = vunpack.c.l.b16 %v426
        %v555 = vunpack.c.l.b16 %v427
        %v556 = vunpack.c.l.b16 %v428
        %v557 = vunpack.c.l.b16 %v429
        %v558 = vunpack.c.l.b16 %v430
        %v559 = vpack.c.b16 %v544, %v543
        %v560 = vpack.c.b16 %v546, %v545
        %v561 = vpack.c.b16 %v548, %v547
        %v562 = vpack.c.b16 %v550, %v549
        %v563 = vpack.c.b16 %v552, %v551
        %v564 = vpack.c.b16 %v554, %v553
        %v565 = vpack.c.b16 %v556, %v555
        %v566 = vpack.c.b16 %v558, %v557
        %575 = vmatprep.subr.bf16.mxu0 0
        %576 = vmatpush1.bf16.msra.mxu0 %v559
        %577 = vmatprep.subr.bf16.mxu0 0
        %578 = vmatpush1.bf16.msra.mxu0 %v560
        %579 = vmatprep.subr.bf16.mxu0 0
        %580 = vmatpush1.bf16.msra.mxu0 %v561
        %581 = vmatprep.subr.bf16.mxu0 0
        %582 = vmatpush1.bf16.msra.mxu0 %v562
        %583 = vmatprep.subr.bf16.mxu0 0
        %584 = vmatpush1.bf16.msra.mxu0 %v563
        %585 = vmatprep.subr.bf16.mxu0 0
        %586 = vmatpush1.bf16.msra.mxu0 %v564
        %587 = vmatprep.subr.bf16.mxu0 0
        %588 = vmatpush1.bf16.msra.mxu0 %v565
        %589 = vmatprep.subr.bf16.mxu0 0
        %590 = vmatpush1.bf16.msra.mxu0 %v566
        %591 = vmatprep.subr.bf16.mxu0 0
        %592 = vmatpush1.bf16.msra.mxu0 0
        %593 = vmatprep.subr.bf16.mxu0 0
        %594 = vmatpush1.bf16.msra.mxu0 0
        %595 = vmatprep.subr.bf16.mxu0 0
        %596 = vmatpush1.bf16.msra.mxu0 0
        %597 = vmatprep.subr.bf16.mxu0 0
        %598 = vmatpush1.bf16.msra.mxu0 0
        %599 = vmatprep.subr.bf16.mxu0 0
        %600 = vmatpush1.bf16.msra.mxu0 0
        %601 = vmatprep.subr.bf16.mxu0 0
        %602 = vmatpush1.bf16.msra.mxu0 0
        %603 = vmatprep.subr.bf16.mxu0 0
        %604 = vmatpush1.bf16.msra.mxu0 0
        %605 = vmatprep.subr.bf16.mxu0 0
        %606 = vmatpush1.bf16.msra.mxu0 0
        %607 = vmatprep.mubr.bf16.mxu0 0
        %608 = vmatmul.mubr.bf16.gmra.mrb[0].mxu0 %v495
        %v609 = vpop.f32.mrb[0].mxu0
        %v610 = vadd.f32 0.0, %v609
        %v611 = vpop.f32.mrb[0].mxu0
        %v612 = vpop.f32.mrb[0].mxu0
        %v613 = vadd.f32 0.0, %v612
        %v614 = vpop.f32.mrb[0].mxu0
        %615 = vmatprep.mubr.bf16.mxu0 0
        %616 = vmatmul.mubr.bf16.gmra.mrb[0].mxu0 %v496
        %v617 = vpop.f32.mrb[0].mxu0
        %v618 = vadd.f32 0.0, %v617
        %v619 = vpop.f32.mrb[0].mxu0
        %v620 = vpop.f32.mrb[0].mxu0
        %v621 = vadd.f32 0.0, %v620
        %v622 = vpop.f32.mrb[0].mxu0
        %623 = vmatprep.mubr.bf16.mxu0 0
        %624 = vmatmul.mubr.bf16.gmra.mrb[0].mxu0 %v497
        %v625 = vpop.f32.mrb[0].mxu0
        %v626 = vadd.f32 0.0, %v625
        %v627 = vpop.f32.mrb[0].mxu0
        %v628 = vpop.f32.mrb[0].mxu0
        %v629 = vadd.f32 0.0, %v628
        %v630 = vpop.f32.mrb[0].mxu0
        %631 = vmatprep.mubr.bf16.mxu0 0
        %632 = vmatmul.mubr.bf16.gmra.mrb[0].mxu0 %v498
        %v633 = vpop.f32.mrb[0].mxu0
        %v634 = vadd.f32 0.0, %v633
        %v635 = vpop.f32.mrb[0].mxu0
        %v636 = vpop.f32.mrb[0].mxu0
        %v637 = vadd.f32 0.0, %v636
        %v638 = vpop.f32.mrb[0].mxu0
        %639 = vmatprep.mubr.bf16.mxu0 0
        %640 = vmatmul.mubr.bf16.gmra.mrb[0].mxu0 %v499
        %v641 = vpop.f32.mrb[0].mxu0
        %v642 = vadd.f32 0.0, %v641
        %v643 = vpop.f32.mrb[0].mxu0
        %v644 = vpop.f32.mrb[0].mxu0
        %v645 = vadd.f32 0.0, %v644
        %v646 = vpop.f32.mrb[0].mxu0
        %647 = vmatprep.mubr.bf16.mxu0 0
        %648 = vmatmul.mubr.bf16.gmra.mrb[0].mxu0 %v500
        %v649 = vpop.f32.mrb[0].mxu0
        %v650 = vadd.f32 0.0, %v649
        %v651 = vpop.f32.mrb[0].mxu0
        %v652 = vpop.f32.mrb[0].mxu0
        %v653 = vadd.f32 0.0, %v652
        %v654 = vpop.f32.mrb[0].mxu0
        %655 = vmatprep.mubr.bf16.mxu0 0
        %656 = vmatmul.mubr.bf16.gmra.mrb[0].mxu0 %v501
        %v657 = vpop.f32.mrb[0].mxu0
        %v658 = vadd.f32 0.0, %v657
        %v659 = vpop.f32.mrb[0].mxu0
        %v660 = vpop.f32.mrb[0].mxu0
        %v661 = vadd.f32 0.0, %v660
        %v662 = vpop.f32.mrb[0].mxu0
        %663 = vmatprep.mubr.bf16.mxu0 0
        %664 = vmatmul.mubr.bf16.gmra.mrb[0].mxu0 %v502
        %v665 = vpop.f32.mrb[0].mxu0
        %v666 = vadd.f32 0.0, %v665
        %v667 = vpop.f32.mrb[0].mxu0
        %v668 = vpop.f32.mrb[0].mxu0
        %v669 = vadd.f32 0.0, %v668
        %v670 = vpop.f32.mrb[0].mxu0
        %671 = vmatprep.mubr.bf16.mxu0 0
        %672 = vmatmul.mubr.bf16.gmra.mrb[0].mxu0 %v503
        %v673 = vpop.f32.mrb[0].mxu0
        %v674 = vadd.f32 0.0, %v673
        %v675 = vpop.f32.mrb[0].mxu0
        %v676 = vpop.f32.mrb[0].mxu0
        %v677 = vadd.f32 0.0, %v676
        %v678 = vpop.f32.mrb[0].mxu0
        %679 = vmatprep.mubr.bf16.mxu0 0
        %680 = vmatmul.mubr.bf16.gmra.mrb[0].mxu0 %v504
        %v681 = vpop.f32.mrb[0].mxu0
        %v682 = vadd.f32 0.0, %v681
        %v683 = vpop.f32.mrb[0].mxu0
        %v684 = vpop.f32.mrb[0].mxu0
        %v685 = vadd.f32 0.0, %v684
        %v686 = vpop.f32.mrb[0].mxu0
        %687 = vmatprep.mubr.bf16.mxu0 0
        %688 = vmatmul.mubr.bf16.gmra.mrb[0].mxu0 %v505
        %v689 = vpop.f32.mrb[0].mxu0
        %v690 = vadd.f32 0.0, %v689
        %v691 = vpop.f32.mrb[0].mxu0
        %v692 = vpop.f32.mrb[0].mxu0
        %v693 = vadd.f32 0.0, %v692
        %v694 = vpop.f32.mrb[0].mxu0
        %695 = vmatprep.mubr.bf16.mxu0 0
        %696 = vmatmul.mubr.bf16.gmra.mrb[0].mxu0 %v506
        %v697 = vpop.f32.mrb[0].mxu0
        %v698 = vadd.f32 0.0, %v697
        %v699 = vpop.f32.mrb[0].mxu0
        %v700 = vpop.f32.mrb[0].mxu0
        %v701 = vadd.f32 0.0, %v700
        %v702 = vpop.f32.mrb[0].mxu0
        %703 = vmatprep.mubr.bf16.mxu0 0
        %704 = vmatmul.mubr.bf16.gmra.mrb[0].mxu0 %v507
        %v705 = vpop.f32.mrb[0].mxu0
        %v706 = vadd.f32 0.0, %v705
        %v707 = vpop.f32.mrb[0].mxu0
        %v708 = vpop.f32.mrb[0].mxu0
        %v709 = vadd.f32 0.0, %v708
        %v710 = vpop.f32.mrb[0].mxu0
        %711 = vmatprep.mubr.bf16.mxu0 0
        %712 = vmatmul.mubr.bf16.gmra.mrb[0].mxu0 %v508
        %v713 = vpop.f32.mrb[0].mxu0
        %v714 = vadd.f32 0.0, %v713
        %v715 = vpop.f32.mrb[0].mxu0
        %v716 = vpop.f32.mrb[0].mxu0
        %v717 = vadd.f32 0.0, %v716
        %v718 = vpop.f32.mrb[0].mxu0
        %719 = vmatprep.mubr.bf16.mxu0 0
        %720 = vmatmul.mubr.bf16.gmra.mrb[0].mxu0 %v509
        %v721 = vpop.f32.mrb[0].mxu0
        %v722 = vadd.f32 0.0, %v721
        %v723 = vpop.f32.mrb[0].mxu0
        %v724 = vpop.f32.mrb[0].mxu0
        %v725 = vadd.f32 0.0, %v724
        %v726 = vpop.f32.mrb[0].mxu0
        %727 = vmatprep.mubr.bf16.mxu0 0
        %728 = vmatmul.mubr.bf16.gmra.mrb[0].mxu0 %v510
        %v729 = vpop.f32.mrb[0].mxu0
        %v730 = vadd.f32 0.0, %v729
        %v731 = vpop.f32.mrb[0].mxu0
        %v732 = vpop.f32.mrb[0].mxu0
        %v733 = vadd.f32 0.0, %v732
        %v734 = vpop.f32.mrb[0].mxu0
        %735 = vdwg.mxu0
        %v736 = vld [vmem:[%s294] sm:$0xf]
        %v737 = vld [vmem:[%s294 + $0x4] sm:$0xf]
        %v738 = vld [vmem:[%s294 + $0x8] sm:$0xf]
        %v739 = vld [vmem:[%s294 + $0xc] sm:$0xf]
        %v740 = vld [vmem:[%s294 + $0x10] sm:$0xf]
        %v741 = vld [vmem:[%s294 + $0x14] sm:$0xf]
        %v742 = vld [vmem:[%s294 + $0x18] sm:$0xf]
        %v743 = vld [vmem:[%s294 + $0x1c] sm:$0xf]
        %v744 = vld [vmem:[%s294 + $0x20] sm:$0xf]
        %v745 = vld [vmem:[%s294 + $0x24] sm:$0xf]
        %v746 = vld [vmem:[%s294 + $0x28] sm:$0xf]
        %v747 = vld [vmem:[%s294 + $0x2c] sm:$0xf]
        %v748 = vld [vmem:[%s294 + $0x30] sm:$0xf]
        %v749 = vld [vmem:[%s294 + $0x34] sm:$0xf]
        %v750 = vld [vmem:[%s294 + $0x38] sm:$0xf]
        %v751 = vld [vmem:[%s294 + $0x3c] sm:$0xf]
        %v768 = vunpack.c.l.b16 %v736
        %v769 = vunpack.c.l.b16 %v737
        %v770 = vunpack.c.l.b16 %v738
        %v771 = vunpack.c.l.b16 %v739
        %v772 = vunpack.c.l.b16 %v740
        %v773 = vunpack.c.l.b16 %v741
        %v774 = vunpack.c.l.b16 %v742
        %v775 = vunpack.c.l.b16 %v743
        %v776 = vunpack.c.l.b16 %v744
        %v777 = vunpack.c.l.b16 %v745
        %v778 = vunpack.c.l.b16 %v746
        %v779 = vunpack.c.l.b16 %v747
        %v780 = vunpack.c.l.b16 %v748
        %v781 = vunpack.c.l.b16 %v749
        %v782 = vunpack.c.l.b16 %v750
        %v783 = vunpack.c.l.b16 %v751
        %v784 = vpack.c.b16 %v769, %v768
        %v785 = vpack.c.b16 %v771, %v770
        %v786 = vpack.c.b16 %v773, %v772
        %v787 = vpack.c.b16 %v775, %v774
        %v788 = vpack.c.b16 %v777, %v776
        %v789 = vpack.c.b16 %v779, %v778
        %v790 = vpack.c.b16 %v781, %v780
        %v791 = vpack.c.b16 %v783, %v782
        %800 = vmatprep.subr.bf16.mxu0 0
        %801 = vmatpush1.bf16.msra.mxu0 %v784
        %802 = vmatprep.subr.bf16.mxu0 0
        %803 = vmatpush1.bf16.msra.mxu0 %v785
        %804 = vmatprep.subr.bf16.mxu0 0
        %805 = vmatpush1.bf16.msra.mxu0 %v786
        %806 = vmatprep.subr.bf16.mxu0 0
        %807 = vmatpush1.bf16.msra.mxu0 %v787
        %808 = vmatprep.subr.bf16.mxu0 0
        %809 = vmatpush1.bf16.msra.mxu0 %v788
        %810 = vmatprep.subr.bf16.mxu0 0
        %811 = vmatpush1.bf16.msra.mxu0 %v789
        %812 = vmatprep.subr.bf16.mxu0 0
        %813 = vmatpush1.bf16.msra.mxu0 %v790
        %814 = vmatprep.subr.bf16.mxu0 0
        %815 = vmatpush1.bf16.msra.mxu0 %v791
        %816 = vmatprep.subr.bf16.mxu0 0
        %817 = vmatpush1.bf16.msra.mxu0 0
        %818 = vmatprep.subr.bf16.mxu0 0
        %819 = vmatpush1.bf16.msra.mxu0 0
        %820 = vmatprep.subr.bf16.mxu0 0
        %821 = vmatpush1.bf16.msra.mxu0 0
        %822 = vmatprep.subr.bf16.mxu0 0
        %823 = vmatpush1.bf16.msra.mxu0 0
        %824 = vmatprep.subr.bf16.mxu0 0
        %825 = vmatpush1.bf16.msra.mxu0 0
        %826 = vmatprep.subr.bf16.mxu0 0
        %827 = vmatpush1.bf16.msra.mxu0 0
        %828 = vmatprep.subr.bf16.mxu0 0
        %829 = vmatpush1.bf16.msra.mxu0 0
        %830 = vmatprep.subr.bf16.mxu0 0
        %831 = vmatpush1.bf16.msra.mxu0 0
        %832 = vmatprep.mubr.bf16.mxu0 0
        %833 = vmatmul.mubr.bf16.gmra.mrb[0].mxu0 %v495
        %v834 = vpop.f32.mrb[0].mxu0
        %v835 = vadd.f32 0.0, %v834
        %v836 = vpop.f32.mrb[0].mxu0
        %v837 = vpop.f32.mrb[0].mxu0
        %v838 = vadd.f32 0.0, %v837
        %v839 = vpop.f32.mrb[0].mxu0
        %840 = vmatprep.mubr.bf16.mxu0 0
        %841 = vmatmul.mubr.bf16.gmra.mrb[0].mxu0 %v496
        %v842 = vpop.f32.mrb[0].mxu0
        %v843 = vadd.f32 0.0, %v842
        %v844 = vpop.f32.mrb[0].mxu0
        %v845 = vpop.f32.mrb[0].mxu0
        %v846 = vadd.f32 0.0, %v845
        %v847 = vpop.f32.mrb[0].mxu0
        %848 = vmatprep.mubr.bf16.mxu0 0
        %849 = vmatmul.mubr.bf16.gmra.mrb[0].mxu0 %v497
        %v850 = vpop.f32.mrb[0].mxu0
        %v851 = vadd.f32 0.0, %v850
        %v852 = vpop.f32.mrb[0].mxu0
        %v853 = vpop.f32.mrb[0].mxu0
        %v854 = vadd.f32 0.0, %v853
        %v855 = vpop.f32.mrb[0].mxu0
        %856 = vmatprep.mubr.bf16.mxu0 0
        %857 = vmatmul.mubr.bf16.gmra.mrb[0].mxu0 %v498
        %v858 = vpop.f32.mrb[0].mxu0
        %v859 = vadd.f32 0.0, %v858
        %v860 = vpop.f32.mrb[0].mxu0
        %v861 = vpop.f32.mrb[0].mxu0
        %v862 = vadd.f32 0.0, %v861
        %v863 = vpop.f32.mrb[0].mxu0
        %864 = vmatprep.mubr.bf16.mxu0 0
        %865 = vmatmul.mubr.bf16.gmra.mrb[0].mxu0 %v499
        %v866 = vpop.f32.mrb[0].mxu0
        %v867 = vadd.f32 0.0, %v866
        %v868 = vpop.f32.mrb[0].mxu0
        %v869 = vpop.f32.mrb[0].mxu0
        %v870 = vadd.f32 0.0, %v869
        %v871 = vpop.f32.mrb[0].mxu0
        %872 = vmatprep.mubr.bf16.mxu0 0
        %873 = vmatmul.mubr.bf16.gmra.mrb[0].mxu0 %v500
        %v874 = vpop.f32.mrb[0].mxu0
        %v875 = vadd.f32 0.0, %v874
        %v876 = vpop.f32.mrb[0].mxu0
        %v877 = vpop.f32.mrb[0].mxu0
        %v878 = vadd.f32 0.0, %v877
        %v879 = vpop.f32.mrb[0].mxu0
        %880 = vmatprep.mubr.bf16.mxu0 0
        %881 = vmatmul.mubr.bf16.gmra.mrb[0].mxu0 %v501
        %v882 = vpop.f32.mrb[0].mxu0
        %v883 = vadd.f32 0.0, %v882
        %v884 = vpop.f32.mrb[0].mxu0
        %v885 = vpop.f32.mrb[0].mxu0
        %v886 = vadd.f32 0.0, %v885
        %v887 = vpop.f32.mrb[0].mxu0
        %888 = vmatprep.mubr.bf16.mxu0 0
        %889 = vmatmul.mubr.bf16.gmra.mrb[0].mxu0 %v502
        %v890 = vpop.f32.mrb[0].mxu0
        %v891 = vadd.f32 0.0, %v890
        %v892 = vpop.f32.mrb[0].mxu0
        %v893 = vpop.f32.mrb[0].mxu0
        %v894 = vadd.f32 0.0, %v893
        %v895 = vpop.f32.mrb[0].mxu0
        %896 = vmatprep.mubr.bf16.mxu0 0
        %897 = vmatmul.mubr.bf16.gmra.mrb[0].mxu0 %v503
        %v898 = vpop.f32.mrb[0].mxu0
        %v899 = vadd.f32 0.0, %v898
        %v900 = vpop.f32.mrb[0].mxu0
        %v901 = vpop.f32.mrb[0].mxu0
        %v902 = vadd.f32 0.0, %v901
        %v903 = vpop.f32.mrb[0].mxu0
        %904 = vmatprep.mubr.bf16.mxu0 0
        %905 = vmatmul.mubr.bf16.gmra.mrb[0].mxu0 %v504
        %v906 = vpop.f32.mrb[0].mxu0
        %v907 = vadd.f32 0.0, %v906
        %v908 = vpop.f32.mrb[0].mxu0
        %v909 = vpop.f32.mrb[0].mxu0
        %v910 = vadd.f32 0.0, %v909
        %v911 = vpop.f32.mrb[0].mxu0
        %912 = vmatprep.mubr.bf16.mxu0 0
        %913 = vmatmul.mubr.bf16.gmra.mrb[0].mxu0 %v505
        %v914 = vpop.f32.mrb[0].mxu0
        %v915 = vadd.f32 0.0, %v914
        %v916 = vpop.f32.mrb[0].mxu0
        %v917 = vpop.f32.mrb[0].mxu0
        %v918 = vadd.f32 0.0, %v917
        %v919 = vpop.f32.mrb[0].mxu0
        %920 = vmatprep.mubr.bf16.mxu0 0
        %921 = vmatmul.mubr.bf16.gmra.mrb[0].mxu0 %v506
        %v922 = vpop.f32.mrb[0].mxu0
        %v923 = vadd.f32 0.0, %v922
        %v924 = vpop.f32.mrb[0].mxu0
        %v925 = vpop.f32.mrb[0].mxu0
        %v926 = vadd.f32 0.0, %v925
        %v927 = vpop.f32.mrb[0].mxu0
        %928 = vmatprep.mubr.bf16.mxu0 0
        %929 = vmatmul.mubr.bf16.gmra.mrb[0].mxu0 %v507
        %v930 = vpop.f32.mrb[0].mxu0
        %v931 = vadd.f32 0.0, %v930
        %v932 = vpop.f32.mrb[0].mxu0
        %v933 = vpop.f32.mrb[0].mxu0
        %v934 = vadd.f32 0.0, %v933
        %v935 = vpop.f32.mrb[0].mxu0
        %936 = vmatprep.mubr.bf16.mxu0 0
        %937 = vmatmul.mubr.bf16.gmra.mrb[0].mxu0 %v508
        %v938 = vpop.f32.mrb[0].mxu0
        %v939 = vadd.f32 0.0, %v938
        %v940 = vpop.f32.mrb[0].mxu0
        %v941 = vpop.f32.mrb[0].mxu0
        %v942 = vadd.f32 0.0, %v941
        %v943 = vpop.f32.mrb[0].mxu0
        %944 = vmatprep.mubr.bf16.mxu0 0
        %945 = vmatmul.mubr.bf16.gmra.mrb[0].mxu0 %v509
        %v946 = vpop.f32.mrb[0].mxu0
        %v947 = vadd.f32 0.0, %v946
        %v948 = vpop.f32.mrb[0].mxu0
        %v949 = vpop.f32.mrb[0].mxu0
        %v950 = vadd.f32 0.0, %v949
        %v951 = vpop.f32.mrb[0].mxu0
        %952 = vmatprep.mubr.bf16.mxu0 0
        %953 = vmatmul.mubr.bf16.gmra.mrb[0].mxu0 %v510
        %v954 = vpop.f32.mrb[0].mxu0
        %v955 = vadd.f32 0.0, %v954
        %v956 = vpop.f32.mrb[0].mxu0
        %v957 = vpop.f32.mrb[0].mxu0
        %v958 = vadd.f32 0.0, %v957
        %v959 = vpop.f32.mrb[0].mxu0
        %960 = vdwg.mxu0
        %v961 = vmul.f32 %v610, %v835
        %v962 = vmul.f32 %v613, %v838
        %v963 = vmul.f32 %v618, %v843
        %v964 = vmul.f32 %v621, %v846
        %v965 = vmul.f32 %v626, %v851
        %v966 = vmul.f32 %v629, %v854
        %v967 = vmul.f32 %v634, %v859
        %v968 = vmul.f32 %v637, %v862
        %v969 = vmul.f32 %v642, %v867
        %v970 = vmul.f32 %v645, %v870
        %v971 = vmul.f32 %v650, %v875
        %v972 = vmul.f32 %v653, %v878
        %v973 = vmul.f32 %v658, %v883
        %v974 = vmul.f32 %v661, %v886
        %v975 = vmul.f32 %v666, %v891
        %v976 = vmul.f32 %v669, %v894
        %v977 = vmul.f32 %v674, %v899
        %v978 = vmul.f32 %v677, %v902
        %v979 = vmul.f32 %v682, %v907
        %v980 = vmul.f32 %v685, %v910
        %v981 = vmul.f32 %v690, %v915
        %v982 = vmul.f32 %v693, %v918
        %v983 = vmul.f32 %v698, %v923
        %v984 = vmul.f32 %v701, %v926
        %v985 = vmul.f32 %v706, %v931
        %v986 = vmul.f32 %v709, %v934
        %v987 = vmul.f32 %v714, %v939
        %v988 = vmul.f32 %v717, %v942
        %v989 = vmul.f32 %v722, %v947
        %v990 = vmul.f32 %v725, %v950
        %v991 = vmul.f32 %v730, %v955
        %v992 = vmul.f32 %v733, %v958
        %v993 = vxor.u32 %v961, 2147483648
        %v994 = vxor.u32 %v962, 2147483648
        %v995 = vxor.u32 %v963, 2147483648
        %v996 = vxor.u32 %v964, 2147483648
        %v997 = vxor.u32 %v965, 2147483648
        %v998 = vxor.u32 %v966, 2147483648
        %v999 = vxor.u32 %v967, 2147483648
        %v1000 = vxor.u32 %v968, 2147483648
        %v1001 = vxor.u32 %v969, 2147483648
        %v1002 = vxor.u32 %v970, 2147483648
        %v1003 = vxor.u32 %v971, 2147483648
        %v1004 = vxor.u32 %v972, 2147483648
        %v1005 = vxor.u32 %v973, 2147483648
        %v1006 = vxor.u32 %v974, 2147483648
        %v1007 = vxor.u32 %v975, 2147483648
        %v1008 = vxor.u32 %v976, 2147483648
        %v1009 = vxor.u32 %v977, 2147483648
        %v1010 = vxor.u32 %v978, 2147483648
        %v1011 = vxor.u32 %v979, 2147483648
        %v1012 = vxor.u32 %v980, 2147483648
        %v1013 = vxor.u32 %v981, 2147483648
        %v1014 = vxor.u32 %v982, 2147483648
        %v1015 = vxor.u32 %v983, 2147483648
        %v1016 = vxor.u32 %v984, 2147483648
        %v1017 = vxor.u32 %v985, 2147483648
        %v1018 = vxor.u32 %v986, 2147483648
        %v1019 = vxor.u32 %v987, 2147483648
        %v1020 = vxor.u32 %v988, 2147483648
        %v1021 = vxor.u32 %v989, 2147483648
        %v1022 = vxor.u32 %v990, 2147483648
        %v1023 = vxor.u32 %v991, 2147483648
        %v1024 = vxor.u32 %v992, 2147483648
        %v1025 = vmul.f32 %v993, 1.442695
        %v1026 = vpow.pop %v1025
        %v1027 = vmul.f32 %v994, 1.442695
        %v1028 = vpow.pop %v1027
        %v1029 = vmul.f32 %v995, 1.442695
        %v1030 = vpow.pop %v1029
        %v1031 = vmul.f32 %v996, 1.442695
        %v1032 = vpow.pop %v1031
        %v1033 = vmul.f32 %v997, 1.442695
        %v1034 = vpow.pop %v1033
        %v1035 = vmul.f32 %v998, 1.442695
        %v1036 = vpow.pop %v1035
        %v1037 = vmul.f32 %v999, 1.442695
        %v1038 = vpow.pop %v1037
        %v1039 = vmul.f32 %v1000, 1.442695
        %v1040 = vpow.pop %v1039
        %v1041 = vmul.f32 %v1001, 1.442695
        %v1042 = vpow.pop %v1041
        %v1043 = vmul.f32 %v1002, 1.442695
        %v1044 = vpow.pop %v1043
        %v1045 = vmul.f32 %v1003, 1.442695
        %v1046 = vpow.pop %v1045
        %v1047 = vmul.f32 %v1004, 1.442695
        %v1048 = vpow.pop %v1047
        %v1049 = vmul.f32 %v1005, 1.442695
        %v1050 = vpow.pop %v1049
        %v1051 = vmul.f32 %v1006, 1.442695
        %v1052 = vpow.pop %v1051
        %v1053 = vmul.f32 %v1007, 1.442695
        %v1054 = vpow.pop %v1053
        %v1055 = vmul.f32 %v1008, 1.442695
        %v1056 = vpow.pop %v1055
        %v1057 = vmul.f32 %v1009, 1.442695
        %v1058 = vpow.pop %v1057
        %v1059 = vmul.f32 %v1010, 1.442695
        %v1060 = vpow.pop %v1059
        %v1061 = vmul.f32 %v1011, 1.442695
        %v1062 = vpow.pop %v1061
        %v1063 = vmul.f32 %v1012, 1.442695
        %v1064 = vpow.pop %v1063
        %v1065 = vmul.f32 %v1013, 1.442695
        %v1066 = vpow.pop %v1065
        %v1067 = vmul.f32 %v1014, 1.442695
        %v1068 = vpow.pop %v1067
        %v1069 = vmul.f32 %v1015, 1.442695
        %v1070 = vpow.pop %v1069
        %v1071 = vmul.f32 %v1016, 1.442695
        %v1072 = vpow.pop %v1071
        %v1073 = vmul.f32 %v1017, 1.442695
        %v1074 = vpow.pop %v1073
        %v1075 = vmul.f32 %v1018, 1.442695
        %v1076 = vpow.pop %v1075
        %v1077 = vmul.f32 %v1019, 1.442695
        %v1078 = vpow.pop %v1077
        %v1079 = vmul.f32 %v1020, 1.442695
        %v1080 = vpow.pop %v1079
        %v1081 = vmul.f32 %v1021, 1.442695
        %v1082 = vpow.pop %v1081
        %v1083 = vmul.f32 %v1022, 1.442695
        %v1084 = vpow.pop %v1083
        %v1085 = vmul.f32 %v1023, 1.442695
        %v1086 = vpow.pop %v1085
        %v1087 = vmul.f32 %v1024, 1.442695
        %v1088 = vpow.pop %v1087
        %v1089 = vadd.f32 %v1026, 1.0
        %v1090 = vadd.f32 %v1028, 1.0
        %v1091 = vadd.f32 %v1030, 1.0
        %v1092 = vadd.f32 %v1032, 1.0
        %v1093 = vadd.f32 %v1034, 1.0
        %v1094 = vadd.f32 %v1036, 1.0
        %v1095 = vadd.f32 %v1038, 1.0
        %v1096 = vadd.f32 %v1040, 1.0
        %v1097 = vadd.f32 %v1042, 1.0
        %v1098 = vadd.f32 %v1044, 1.0
        %v1099 = vadd.f32 %v1046, 1.0
        %v1100 = vadd.f32 %v1048, 1.0
        %v1101 = vadd.f32 %v1050, 1.0
        %v1102 = vadd.f32 %v1052, 1.0
        %v1103 = vadd.f32 %v1054, 1.0
        %v1104 = vadd.f32 %v1056, 1.0
        %v1105 = vadd.f32 %v1058, 1.0
        %v1106 = vadd.f32 %v1060, 1.0
        %v1107 = vadd.f32 %v1062, 1.0
        %v1108 = vadd.f32 %v1064, 1.0
        %v1109 = vadd.f32 %v1066, 1.0
        %v1110 = vadd.f32 %v1068, 1.0
        %v1111 = vadd.f32 %v1070, 1.0
        %v1112 = vadd.f32 %v1072, 1.0
        %v1113 = vadd.f32 %v1074, 1.0
        %v1114 = vadd.f32 %v1076, 1.0
        %v1115 = vadd.f32 %v1078, 1.0
        %v1116 = vadd.f32 %v1080, 1.0
        %v1117 = vadd.f32 %v1082, 1.0
        %v1118 = vadd.f32 %v1084, 1.0
        %v1119 = vadd.f32 %v1086, 1.0
        %v1120 = vadd.f32 %v1088, 1.0
        %v1121 = vrcp.pop %v1089
        %v1122 = vmul.f32 1.0, %v1121
        %v1123 = vrcp.pop %v1090
        %v1124 = vmul.f32 1.0, %v1123
        %v1125 = vrcp.pop %v1091
        %v1126 = vmul.f32 1.0, %v1125
        %v1127 = vrcp.pop %v1092
        %v1128 = vmul.f32 1.0, %v1127
        %v1129 = vrcp.pop %v1093
        %v1130 = vmul.f32 1.0, %v1129
        %v1131 = vrcp.pop %v1094
        %v1132 = vmul.f32 1.0, %v1131
        %v1133 = vrcp.pop %v1095
        %v1134 = vmul.f32 1.0, %v1133
        %v1135 = vrcp.pop %v1096
        %v1136 = vmul.f32 1.0, %v1135
        %v1137 = vrcp.pop %v1097
        %v1138 = vmul.f32 1.0, %v1137
        %v1139 = vrcp.pop %v1098
        %v1140 = vmul.f32 1.0, %v1139
        %v1141 = vrcp.pop %v1099
        %v1142 = vmul.f32 1.0, %v1141
        %v1143 = vrcp.pop %v1100
        %v1144 = vmul.f32 1.0, %v1143
        %v1145 = vrcp.pop %v1101
        %v1146 = vmul.f32 1.0, %v1145
        %v1147 = vrcp.pop %v1102
        %v1148 = vmul.f32 1.0, %v1147
        %v1149 = vrcp.pop %v1103
        %v1150 = vmul.f32 1.0, %v1149
        %v1151 = vrcp.pop %v1104
        %v1152 = vmul.f32 1.0, %v1151
        %v1153 = vrcp.pop %v1105
        %v1154 = vmul.f32 1.0, %v1153
        %v1155 = vrcp.pop %v1106
        %v1156 = vmul.f32 1.0, %v1155
        %v1157 = vrcp.pop %v1107
        %v1158 = vmul.f32 1.0, %v1157
        %v1159 = vrcp.pop %v1108
        %v1160 = vmul.f32 1.0, %v1159
        %v1161 = vrcp.pop %v1109
        %v1162 = vmul.f32 1.0, %v1161
        %v1163 = vrcp.pop %v1110
        %v1164 = vmul.f32 1.0, %v1163
        %v1165 = vrcp.pop %v1111
        %v1166 = vmul.f32 1.0, %v1165
        %v1167 = vrcp.pop %v1112
        %v1168 = vmul.f32 1.0, %v1167
        %v1169 = vrcp.pop %v1113
        %v1170 = vmul.f32 1.0, %v1169
        %v1171 = vrcp.pop %v1114
        %v1172 = vmul.f32 1.0, %v1171
        %v1173 = vrcp.pop %v1115
        %v1174 = vmul.f32 1.0, %v1173
        %v1175 = vrcp.pop %v1116
        %v1176 = vmul.f32 1.0, %v1175
        %v1177 = vrcp.pop %v1117
        %v1178 = vmul.f32 1.0, %v1177
        %v1179 = vrcp.pop %v1118
        %v1180 = vmul.f32 1.0, %v1179
        %v1181 = vrcp.pop %v1119
        %v1182 = vmul.f32 1.0, %v1181
        %v1183 = vrcp.pop %v1120
        %v1184 = vmul.f32 1.0, %v1183
        %v1185 = vmul.f32 %v961, %v1122
        %v1186 = vmul.f32 %v962, %v1124
        %v1187 = vmul.f32 %v963, %v1126
        %v1188 = vmul.f32 %v964, %v1128
        %v1189 = vmul.f32 %v965, %v1130
        %v1190 = vmul.f32 %v966, %v1132
        %v1191 = vmul.f32 %v967, %v1134
        %v1192 = vmul.f32 %v968, %v1136
        %v1193 = vmul.f32 %v969, %v1138
        %v1194 = vmul.f32 %v970, %v1140
        %v1195 = vmul.f32 %v971, %v1142
        %v1196 = vmul.f32 %v972, %v1144
        %v1197 = vmul.f32 %v973, %v1146
        %v1198 = vmul.f32 %v974, %v1148
        %v1199 = vmul.f32 %v975, %v1150
        %v1200 = vmul.f32 %v976, %v1152
        %v1201 = vmul.f32 %v977, %v1154
        %v1202 = vmul.f32 %v978, %v1156
        %v1203 = vmul.f32 %v979, %v1158
        %v1204 = vmul.f32 %v980, %v1160
        %v1205 = vmul.f32 %v981, %v1162
        %v1206 = vmul.f32 %v982, %v1164
        %v1207 = vmul.f32 %v983, %v1166
        %v1208 = vmul.f32 %v984, %v1168
        %v1209 = vmul.f32 %v985, %v1170
        %v1210 = vmul.f32 %v986, %v1172
        %v1211 = vmul.f32 %v987, %v1174
        %v1212 = vmul.f32 %v988, %v1176
        %v1213 = vmul.f32 %v989, %v1178
        %v1214 = vmul.f32 %v990, %v1180
        %v1215 = vmul.f32 %v991, %v1182
        %v1216 = vmul.f32 %v992, %v1184
        %v1217 = vld [vmem:[#allocation2] sm:$0xff]
        %v1218 = vld [vmem:[#allocation2 + $0x8] sm:$0xff]
        %v1219 = vld [vmem:[#allocation2 + $0x10] sm:$0xff]
        %v1220 = vld [vmem:[#allocation2 + $0x18] sm:$0xff]
        %v1221 = vld [vmem:[#allocation2 + $0x20] sm:$0xff]
        %v1222 = vld [vmem:[#allocation2 + $0x28] sm:$0xff]
        %v1223 = vld [vmem:[#allocation2 + $0x30] sm:$0xff]
        %v1224 = vld [vmem:[#allocation2 + $0x38] sm:$0xff]
        %v1225 = vld [vmem:[#allocation2 + $0x40] sm:$0xff]
        %v1226 = vld [vmem:[#allocation2 + $0x48] sm:$0xff]
        %v1227 = vld [vmem:[#allocation2 + $0x50] sm:$0xff]
        %v1228 = vld [vmem:[#allocation2 + $0x58] sm:$0xff]
        %v1229 = vld [vmem:[#allocation2 + $0x60] sm:$0xff]
        %v1230 = vld [vmem:[#allocation2 + $0x68] sm:$0xff]
        %v1231 = vld [vmem:[#allocation2 + $0x70] sm:$0xff]
        %v1232 = vld [vmem:[#allocation2 + $0x78] sm:$0xff]
        %v1233 = vld [vmem:[#allocation2 + $0x80] sm:$0xff]
        %v1234 = vld [vmem:[#allocation2 + $0x88] sm:$0xff]
        %v1235 = vld [vmem:[#allocation2 + $0x90] sm:$0xff]
        %v1236 = vld [vmem:[#allocation2 + $0x98] sm:$0xff]
        %v1237 = vld [vmem:[#allocation2 + $0xa0] sm:$0xff]
        %v1238 = vld [vmem:[#allocation2 + $0xa8] sm:$0xff]
        %v1239 = vld [vmem:[#allocation2 + $0xb0] sm:$0xff]
        %v1240 = vld [vmem:[#allocation2 + $0xb8] sm:$0xff]
        %v1241 = vld [vmem:[#allocation2 + $0xc0] sm:$0xff]
        %v1242 = vld [vmem:[#allocation2 + $0xc8] sm:$0xff]
        %v1243 = vld [vmem:[#allocation2 + $0xd0] sm:$0xff]
        %v1244 = vld [vmem:[#allocation2 + $0xd8] sm:$0xff]
        %v1245 = vld [vmem:[#allocation2 + $0xe0] sm:$0xff]
        %v1246 = vld [vmem:[#allocation2 + $0xe8] sm:$0xff]
        %v1247 = vld [vmem:[#allocation2 + $0xf0] sm:$0xff]
        %v1248 = vld [vmem:[#allocation2 + $0xf8] sm:$0xff]
        %v1249 = vpack.c.bf16 %v1186, %v1185
        %v1250 = vpack.c.bf16 %v1188, %v1187
        %v1251 = vpack.c.bf16 %v1190, %v1189
        %v1252 = vpack.c.bf16 %v1192, %v1191
        %v1253 = vpack.c.bf16 %v1194, %v1193
        %v1254 = vpack.c.bf16 %v1196, %v1195
        %v1255 = vpack.c.bf16 %v1198, %v1197
        %v1256 = vpack.c.bf16 %v1200, %v1199
        %v1257 = vpack.c.bf16 %v1202, %v1201
        %v1258 = vpack.c.bf16 %v1204, %v1203
        %v1259 = vpack.c.bf16 %v1206, %v1205
        %v1260 = vpack.c.bf16 %v1208, %v1207
        %v1261 = vpack.c.bf16 %v1210, %v1209
        %v1262 = vpack.c.bf16 %v1212, %v1211
        %v1263 = vpack.c.bf16 %v1214, %v1213
        %v1264 = vpack.c.bf16 %v1216, %v1215
        %v1265 = vld [vmem:[%s303] sm:$0xf]
        %v1266 = vld [vmem:[%s303 + $0x4] sm:$0xf]
        %v1267 = vld [vmem:[%s303 + $0x8] sm:$0xf]
        %v1268 = vld [vmem:[%s303 + $0xc] sm:$0xf]
        %v1269 = vld [vmem:[%s303 + $0x10] sm:$0xf]
        %v1270 = vld [vmem:[%s303 + $0x14] sm:$0xf]
        %v1271 = vld [vmem:[%s303 + $0x18] sm:$0xf]
        %v1272 = vld [vmem:[%s303 + $0x1c] sm:$0xf]
        %v1273 = vld [vmem:[%s303 + $0x20] sm:$0xf]
        %v1274 = vld [vmem:[%s303 + $0x24] sm:$0xf]
        %v1275 = vld [vmem:[%s303 + $0x28] sm:$0xf]
        %v1276 = vld [vmem:[%s303 + $0x2c] sm:$0xf]
        %v1277 = vld [vmem:[%s303 + $0x30] sm:$0xf]
        %v1278 = vld [vmem:[%s303 + $0x34] sm:$0xf]
        %v1279 = vld [vmem:[%s303 + $0x38] sm:$0xf]
        %v1280 = vld [vmem:[%s303 + $0x3c] sm:$0xf]
        %v1297 = vunpack.c.l.b16 %v1265
        %v1298 = vunpack.c.l.b16 %v1266
        %v1299 = vunpack.c.l.b16 %v1267
        %v1300 = vunpack.c.l.b16 %v1268
        %v1301 = vunpack.c.l.b16 %v1269
        %v1302 = vunpack.c.l.b16 %v1270
        %v1303 = vunpack.c.l.b16 %v1271
        %v1304 = vunpack.c.l.b16 %v1272
        %v1305 = vunpack.c.l.b16 %v1273
        %v1306 = vunpack.c.l.b16 %v1274
        %v1307 = vunpack.c.l.b16 %v1275
        %v1308 = vunpack.c.l.b16 %v1276
        %v1309 = vunpack.c.l.b16 %v1277
        %v1310 = vunpack.c.l.b16 %v1278
        %v1311 = vunpack.c.l.b16 %v1279
        %v1312 = vunpack.c.l.b16 %v1280
        %v1313 = vpack.c.b16 %v1298, %v1297
        %v1314 = vpack.c.b16 %v1300, %v1299
        %v1315 = vpack.c.b16 %v1302, %v1301
        %v1316 = vpack.c.b16 %v1304, %v1303
        %v1317 = vpack.c.b16 %v1306, %v1305
        %v1318 = vpack.c.b16 %v1308, %v1307
        %v1319 = vpack.c.b16 %v1310, %v1309
        %v1320 = vpack.c.b16 %v1312, %v1311
        %1329 = vmatprep.subr.bf16.mxu0 0
        %1330 = vmatpush1.bf16.msra.mxu0 %v1313
        %1331 = vmatprep.subr.bf16.mxu0 0
        %1332 = vmatpush1.bf16.msra.mxu0 %v1314
        %1333 = vmatprep.subr.bf16.mxu0 0
        %1334 = vmatpush1.bf16.msra.mxu0 %v1315
        %1335 = vmatprep.subr.bf16.mxu0 0
        %1336 = vmatpush1.bf16.msra.mxu0 %v1316
        %1337 = vmatprep.subr.bf16.mxu0 0
        %1338 = vmatpush1.bf16.msra.mxu0 %v1317
        %1339 = vmatprep.subr.bf16.mxu0 0
        %1340 = vmatpush1.bf16.msra.mxu0 %v1318
        %1341 = vmatprep.subr.bf16.mxu0 0
        %1342 = vmatpush1.bf16.msra.mxu0 %v1319
        %1343 = vmatprep.subr.bf16.mxu0 0
        %1344 = vmatpush1.bf16.msra.mxu0 %v1320
        %1345 = vmatprep.subr.bf16.mxu0 0
        %1346 = vmatpush1.bf16.msra.mxu0 0
        %1347 = vmatprep.subr.bf16.mxu0 0
        %1348 = vmatpush1.bf16.msra.mxu0 0
        %1349 = vmatprep.subr.bf16.mxu0 0
        %1350 = vmatpush1.bf16.msra.mxu0 0
        %1351 = vmatprep.subr.bf16.mxu0 0
        %1352 = vmatpush1.bf16.msra.mxu0 0
        %1353 = vmatprep.subr.bf16.mxu0 0
        %1354 = vmatpush1.bf16.msra.mxu0 0
        %1355 = vmatprep.subr.bf16.mxu0 0
        %1356 = vmatpush1.bf16.msra.mxu0 0
        %1357 = vmatprep.subr.bf16.mxu0 0
        %1358 = vmatpush1.bf16.msra.mxu0 0
        %1359 = vmatprep.subr.bf16.mxu0 0
        %1360 = vmatpush1.bf16.msra.mxu0 0
        %1361 = vmatprep.mubr.bf16.mxu0 0
        %1362 = vmatmul.mubr.bf16.gmra.mrb[0].mxu0 %v1249
        %v1363 = vpop.f32.mrb[0].mxu0
        %v1364 = vadd.f32 0.0, %v1363
        %v1365 = vpop.f32.mrb[0].mxu0
        %v1366 = vpop.f32.mrb[0].mxu0
        %v1367 = vadd.f32 0.0, %v1366
        %v1368 = vpop.f32.mrb[0].mxu0
        %1369 = vmatprep.mubr.bf16.mxu0 0
        %1370 = vmatmul.mubr.bf16.gmra.mrb[0].mxu0 %v1250
        %v1371 = vpop.f32.mrb[0].mxu0
        %v1372 = vadd.f32 0.0, %v1371
        %v1373 = vpop.f32.mrb[0].mxu0
        %v1374 = vpop.f32.mrb[0].mxu0
        %v1375 = vadd.f32 0.0, %v1374
        %v1376 = vpop.f32.mrb[0].mxu0
        %1377 = vmatprep.mubr.bf16.mxu0 0
        %1378 = vmatmul.mubr.bf16.gmra.mrb[0].mxu0 %v1251
        %v1379 = vpop.f32.mrb[0].mxu0
        %v1380 = vadd.f32 0.0, %v1379
        %v1381 = vpop.f32.mrb[0].mxu0
        %v1382 = vpop.f32.mrb[0].mxu0
        %v1383 = vadd.f32 0.0, %v1382
        %v1384 = vpop.f32.mrb[0].mxu0
        %1385 = vmatprep.mubr.bf16.mxu0 0
        %1386 = vmatmul.mubr.bf16.gmra.mrb[0].mxu0 %v1252
        %v1387 = vpop.f32.mrb[0].mxu0
        %v1388 = vadd.f32 0.0, %v1387
        %v1389 = vpop.f32.mrb[0].mxu0
        %v1390 = vpop.f32.mrb[0].mxu0
        %v1391 = vadd.f32 0.0, %v1390
        %v1392 = vpop.f32.mrb[0].mxu0
        %1393 = vmatprep.mubr.bf16.mxu0 0
        %1394 = vmatmul.mubr.bf16.gmra.mrb[0].mxu0 %v1253
        %v1395 = vpop.f32.mrb[0].mxu0
        %v1396 = vadd.f32 0.0, %v1395
        %v1397 = vpop.f32.mrb[0].mxu0
        %v1398 = vpop.f32.mrb[0].mxu0
        %v1399 = vadd.f32 0.0, %v1398
        %v1400 = vpop.f32.mrb[0].mxu0
        %1401 = vmatprep.mubr.bf16.mxu0 0
        %1402 = vmatmul.mubr.bf16.gmra.mrb[0].mxu0 %v1254
        %v1403 = vpop.f32.mrb[0].mxu0
        %v1404 = vadd.f32 0.0, %v1403
        %v1405 = vpop.f32.mrb[0].mxu0
        %v1406 = vpop.f32.mrb[0].mxu0
        %v1407 = vadd.f32 0.0, %v1406
        %v1408 = vpop.f32.mrb[0].mxu0
        %1409 = vmatprep.mubr.bf16.mxu0 0
        %1410 = vmatmul.mubr.bf16.gmra.mrb[0].mxu0 %v1255
        %v1411 = vpop.f32.mrb[0].mxu0
        %v1412 = vadd.f32 0.0, %v1411
        %v1413 = vpop.f32.mrb[0].mxu0
        %v1414 = vpop.f32.mrb[0].mxu0
        %v1415 = vadd.f32 0.0, %v1414
        %v1416 = vpop.f32.mrb[0].mxu0
        %1417 = vmatprep.mubr.bf16.mxu0 0
        %1418 = vmatmul.mubr.bf16.gmra.mrb[0].mxu0 %v1256
        %v1419 = vpop.f32.mrb[0].mxu0
        %v1420 = vadd.f32 0.0, %v1419
        %v1421 = vpop.f32.mrb[0].mxu0
        %v1422 = vpop.f32.mrb[0].mxu0
        %v1423 = vadd.f32 0.0, %v1422
        %v1424 = vpop.f32.mrb[0].mxu0
        %1425 = vmatprep.mubr.bf16.mxu0 0
        %1426 = vmatmul.mubr.bf16.gmra.mrb[0].mxu0 %v1257
        %v1427 = vpop.f32.mrb[0].mxu0
        %v1428 = vadd.f32 0.0, %v1427
        %v1429 = vpop.f32.mrb[0].mxu0
        %v1430 = vpop.f32.mrb[0].mxu0
        %v1431 = vadd.f32 0.0, %v1430
        %v1432 = vpop.f32.mrb[0].mxu0
        %1433 = vmatprep.mubr.bf16.mxu0 0
        %1434 = vmatmul.mubr.bf16.gmra.mrb[0].mxu0 %v1258
        %v1435 = vpop.f32.mrb[0].mxu0
        %v1436 = vadd.f32 0.0, %v1435
        %v1437 = vpop.f32.mrb[0].mxu0
        %v1438 = vpop.f32.mrb[0].mxu0
        %v1439 = vadd.f32 0.0, %v1438
        %v1440 = vpop.f32.mrb[0].mxu0
        %1441 = vmatprep.mubr.bf16.mxu0 0
        %1442 = vmatmul.mubr.bf16.gmra.mrb[0].mxu0 %v1259
        %v1443 = vpop.f32.mrb[0].mxu0
        %v1444 = vadd.f32 0.0, %v1443
        %v1445 = vpop.f32.mrb[0].mxu0
        %v1446 = vpop.f32.mrb[0].mxu0
        %v1447 = vadd.f32 0.0, %v1446
        %v1448 = vpop.f32.mrb[0].mxu0
        %1449 = vmatprep.mubr.bf16.mxu0 0
        %1450 = vmatmul.mubr.bf16.gmra.mrb[0].mxu0 %v1260
        %v1451 = vpop.f32.mrb[0].mxu0
        %v1452 = vadd.f32 0.0, %v1451
        %v1453 = vpop.f32.mrb[0].mxu0
        %v1454 = vpop.f32.mrb[0].mxu0
        %v1455 = vadd.f32 0.0, %v1454
        %v1456 = vpop.f32.mrb[0].mxu0
        %1457 = vmatprep.mubr.bf16.mxu0 0
        %1458 = vmatmul.mubr.bf16.gmra.mrb[0].mxu0 %v1261
        %v1459 = vpop.f32.mrb[0].mxu0
        %v1460 = vadd.f32 0.0, %v1459
        %v1461 = vpop.f32.mrb[0].mxu0
        %v1462 = vpop.f32.mrb[0].mxu0
        %v1463 = vadd.f32 0.0, %v1462
        %v1464 = vpop.f32.mrb[0].mxu0
        %1465 = vmatprep.mubr.bf16.mxu0 0
        %1466 = vmatmul.mubr.bf16.gmra.mrb[0].mxu0 %v1262
        %v1467 = vpop.f32.mrb[0].mxu0
        %v1468 = vadd.f32 0.0, %v1467
        %v1469 = vpop.f32.mrb[0].mxu0
        %v1470 = vpop.f32.mrb[0].mxu0
        %v1471 = vadd.f32 0.0, %v1470
        %v1472 = vpop.f32.mrb[0].mxu0
        %1473 = vmatprep.mubr.bf16.mxu0 0
        %1474 = vmatmul.mubr.bf16.gmra.mrb[0].mxu0 %v1263
        %v1475 = vpop.f32.mrb[0].mxu0
        %v1476 = vadd.f32 0.0, %v1475
        %v1477 = vpop.f32.mrb[0].mxu0
        %v1478 = vpop.f32.mrb[0].mxu0
        %v1479 = vadd.f32 0.0, %v1478
        %v1480 = vpop.f32.mrb[0].mxu0
        %1481 = vmatprep.mubr.bf16.mxu0 0
        %1482 = vmatmul.mubr.bf16.gmra.mrb[0].mxu0 %v1264
        %v1483 = vpop.f32.mrb[0].mxu0
        %v1484 = vadd.f32 0.0, %v1483
        %v1485 = vpop.f32.mrb[0].mxu0
        %v1486 = vpop.f32.mrb[0].mxu0
        %v1487 = vadd.f32 0.0, %v1486
        %v1488 = vpop.f32.mrb[0].mxu0
        %1489 = vdwg.mxu0
        %v1490 = vadd.f32 %v1217, %v1364
        %v1491 = vadd.f32 %v1218, %v1367
        %v1492 = vadd.f32 %v1219, %v1372
        %v1493 = vadd.f32 %v1220, %v1375
        %v1494 = vadd.f32 %v1221, %v1380
        %v1495 = vadd.f32 %v1222, %v1383
        %v1496 = vadd.f32 %v1223, %v1388
        %v1497 = vadd.f32 %v1224, %v1391
        %v1498 = vadd.f32 %v1225, %v1396
        %v1499 = vadd.f32 %v1226, %v1399
        %v1500 = vadd.f32 %v1227, %v1404
        %v1501 = vadd.f32 %v1228, %v1407
        %v1502 = vadd.f32 %v1229, %v1412
        %v1503 = vadd.f32 %v1230, %v1415
        %v1504 = vadd.f32 %v1231, %v1420
        %v1505 = vadd.f32 %v1232, %v1423
        %v1506 = vadd.f32 %v1233, %v1428
        %v1507 = vadd.f32 %v1234, %v1431
        %v1508 = vadd.f32 %v1235, %v1436
        %v1509 = vadd.f32 %v1236, %v1439
        %v1510 = vadd.f32 %v1237, %v1444
        %v1511 = vadd.f32 %v1238, %v1447
        %v1512 = vadd.f32 %v1239, %v1452
        %v1513 = vadd.f32 %v1240, %v1455
        %v1514 = vadd.f32 %v1241, %v1460
        %v1515 = vadd.f32 %v1242, %v1463
        %v1516 = vadd.f32 %v1243, %v1468
        %v1517 = vadd.f32 %v1244, %v1471
        %v1518 = vadd.f32 %v1245, %v1476
        %v1519 = vadd.f32 %v1246, %v1479
        %v1520 = vadd.f32 %v1247, %v1484
        %v1521 = vadd.f32 %v1248, %v1487
        %1522 = vst [vmem:[#allocation2] sm:$0xff] %v1490
        %1523 = vst [vmem:[#allocation2 + $0x8] sm:$0xff] %v1491
        %1524 = vst [vmem:[#allocation2 + $0x10] sm:$0xff] %v1492
        %1525 = vst [vmem:[#allocation2 + $0x18] sm:$0xff] %v1493
        %1526 = vst [vmem:[#allocation2 + $0x20] sm:$0xff] %v1494
        %1527 = vst [vmem:[#allocation2 + $0x28] sm:$0xff] %v1495
        %1528 = vst [vmem:[#allocation2 + $0x30] sm:$0xff] %v1496
        %1529 = vst [vmem:[#allocation2 + $0x38] sm:$0xff] %v1497
        %1530 = vst [vmem:[#allocation2 + $0x40] sm:$0xff] %v1498
        %1531 = vst [vmem:[#allocation2 + $0x48] sm:$0xff] %v1499
        %1532 = vst [vmem:[#allocation2 + $0x50] sm:$0xff] %v1500
        %1533 = vst [vmem:[#allocation2 + $0x58] sm:$0xff] %v1501
        %1534 = vst [vmem:[#allocation2 + $0x60] sm:$0xff] %v1502
        %1535 = vst [vmem:[#allocation2 + $0x68] sm:$0xff] %v1503
        %1536 = vst [vmem:[#allocation2 + $0x70] sm:$0xff] %v1504
        %1537 = vst [vmem:[#allocation2 + $0x78] sm:$0xff] %v1505
        %1538 = vst [vmem:[#allocation2 + $0x80] sm:$0xff] %v1506
        %1539 = vst [vmem:[#allocation2 + $0x88] sm:$0xff] %v1507
        %1540 = vst [vmem:[#allocation2 + $0x90] sm:$0xff] %v1508
        %1541 = vst [vmem:[#allocation2 + $0x98] sm:$0xff] %v1509
        %1542 = vst [vmem:[#allocation2 + $0xa0] sm:$0xff] %v1510
        %1543 = vst [vmem:[#allocation2 + $0xa8] sm:$0xff] %v1511
        %1544 = vst [vmem:[#allocation2 + $0xb0] sm:$0xff] %v1512
        %1545 = vst [vmem:[#allocation2 + $0xb8] sm:$0xff] %v1513
        %1546 = vst [vmem:[#allocation2 + $0xc0] sm:$0xff] %v1514
        %1547 = vst [vmem:[#allocation2 + $0xc8] sm:$0xff] %v1515
        %1548 = vst [vmem:[#allocation2 + $0xd0] sm:$0xff] %v1516
        %1549 = vst [vmem:[#allocation2 + $0xd8] sm:$0xff] %v1517
        %1550 = vst [vmem:[#allocation2 + $0xe0] sm:$0xff] %v1518
        %1551 = vst [vmem:[#allocation2 + $0xe8] sm:$0xff] %v1519
        %1552 = vst [vmem:[#allocation2 + $0xf0] sm:$0xff] %v1520
        %1553 = vst [vmem:[#allocation2 + $0xf8] sm:$0xff] %v1521
        %p1554 = scmp.eq.s32.totalorder %s32, 2
        // Predicated region
        $region57: #{tpu_custom_call.1} parent=35 // pred_check
          %p1555 = pneg %p1554
        $region58: #{tpu_custom_call.1} parent=35 // pred_check_branch
          %1557 = sbr.rel (%p1555) target = $region60
        $region59: #{tpu_custom_call.1} parent=35 // pred_region
          %v1558 = vld [vmem:[#allocation2] sm:$0xff]
          %v1559 = vld [vmem:[#allocation2 + $0x8] sm:$0xff]
          %v1560 = vld [vmem:[#allocation2 + $0x10] sm:$0xff]
          %v1561 = vld [vmem:[#allocation2 + $0x18] sm:$0xff]
          %v1562 = vld [vmem:[#allocation2 + $0x20] sm:$0xff]
          %v1563 = vld [vmem:[#allocation2 + $0x28] sm:$0xff]
          %v1564 = vld [vmem:[#allocation2 + $0x30] sm:$0xff]
          %v1565 = vld [vmem:[#allocation2 + $0x38] sm:$0xff]
          %v1566 = vld [vmem:[#allocation2 + $0x40] sm:$0xff]
          %v1567 = vld [vmem:[#allocation2 + $0x48] sm:$0xff]
          %v1568 = vld [vmem:[#allocation2 + $0x50] sm:$0xff]
          %v1569 = vld [vmem:[#allocation2 + $0x58] sm:$0xff]
          %v1570 = vld [vmem:[#allocation2 + $0x60] sm:$0xff]
          %v1571 = vld [vmem:[#allocation2 + $0x68] sm:$0xff]
          %v1572 = vld [vmem:[#allocation2 + $0x70] sm:$0xff]
          %v1573 = vld [vmem:[#allocation2 + $0x78] sm:$0xff]
          %v1574 = vld [vmem:[#allocation2 + $0x80] sm:$0xff]
          %v1575 = vld [vmem:[#allocation2 + $0x88] sm:$0xff]
          %v1576 = vld [vmem:[#allocation2 + $0x90] sm:$0xff]
          %v1577 = vld [vmem:[#allocation2 + $0x98] sm:$0xff]
          %v1578 = vld [vmem:[#allocation2 + $0xa0] sm:$0xff]
          %v1579 = vld [vmem:[#allocation2 + $0xa8] sm:$0xff]
          %v1580 = vld [vmem:[#allocation2 + $0xb0] sm:$0xff]
          %v1581 = vld [vmem:[#allocation2 + $0xb8] sm:$0xff]
          %v1582 = vld [vmem:[#allocation2 + $0xc0] sm:$0xff]
          %v1583 = vld [vmem:[#allocation2 + $0xc8] sm:$0xff]
          %v1584 = vld [vmem:[#allocation2 + $0xd0] sm:$0xff]
          %v1585 = vld [vmem:[#allocation2 + $0xd8] sm:$0xff]
          %v1586 = vld [vmem:[#allocation2 + $0xe0] sm:$0xff]
          %v1587 = vld [vmem:[#allocation2 + $0xe8] sm:$0xff]
          %v1588 = vld [vmem:[#allocation2 + $0xf0] sm:$0xff]
          %v1589 = vld [vmem:[#allocation2 + $0xf8] sm:$0xff]
          %1590 = vst [vmem:[%s342] sm:$0xff] %v1558
          %1591 = vst [vmem:[%s342 + $0x8] sm:$0xff] %v1559
          %1592 = vst [vmem:[%s342 + $0x10] sm:$0xff] %v1560
          %1593 = vst [vmem:[%s342 + $0x18] sm:$0xff] %v1561
          %1594 = vst [vmem:[%s342 + $0x20] sm:$0xff] %v1562
          %1595 = vst [vmem:[%s342 + $0x28] sm:$0xff] %v1563
          %1596 = vst [vmem:[%s342 + $0x30] sm:$0xff] %v1564
          %1597 = vst [vmem:[%s342 + $0x38] sm:$0xff] %v1565
          %1598 = vst [vmem:[%s342 + $0x40] sm:$0xff] %v1566
          %1599 = vst [vmem:[%s342 + $0x48] sm:$0xff] %v1567
          %1600 = vst [vmem:[%s342 + $0x50] sm:$0xff] %v1568
          %1601 = vst [vmem:[%s342 + $0x58] sm:$0xff] %v1569
          %1602 = vst [vmem:[%s342 + $0x60] sm:$0xff] %v1570
          %1603 = vst [vmem:[%s342 + $0x68] sm:$0xff] %v1571
          %1604 = vst [vmem:[%s342 + $0x70] sm:$0xff] %v1572
          %1605 = vst [vmem:[%s342 + $0x78] sm:$0xff] %v1573
          %1606 = vst [vmem:[%s342 + $0x80] sm:$0xff] %v1574
          %1607 = vst [vmem:[%s342 + $0x88] sm:$0xff] %v1575
          %1608 = vst [vmem:[%s342 + $0x90] sm:$0xff] %v1576
          %1609 = vst [vmem:[%s342 + $0x98] sm:$0xff] %v1577
          %1610 = vst [vmem:[%s342 + $0xa0] sm:$0xff] %v1578
          %1611 = vst [vmem:[%s342 + $0xa8] sm:$0xff] %v1579
          %1612 = vst [vmem:[%s342 + $0xb0] sm:$0xff] %v1580
          %1613 = vst [vmem:[%s342 + $0xb8] sm:$0xff] %v1581
          %1614 = vst [vmem:[%s342 + $0xc0] sm:$0xff] %v1582
          %1615 = vst [vmem:[%s342 + $0xc8] sm:$0xff] %v1583
          %1616 = vst [vmem:[%s342 + $0xd0] sm:$0xff] %v1584
          %1617 = vst [vmem:[%s342 + $0xd8] sm:$0xff] %v1585
          %1618 = vst [vmem:[%s342 + $0xe0] sm:$0xff] %v1586
          %1619 = vst [vmem:[%s342 + $0xe8] sm:$0xff] %v1587
          %1620 = vst [vmem:[%s342 + $0xf0] sm:$0xff] %v1588
          %1621 = vst [vmem:[%s342 + $0xf8] sm:$0xff] %v1589
        $region60: #{tpu_custom_call.1} parent=35 // pred_fallthru
          _
        %s1622 = sand.u32 %s151, 1
        %s1623 = scalar_lea.sflag [#allocation5], %s1622
        %s1624 = sand.u32 %s151, 1
        %s1625 = smul.addr %s1624, 256
        %s1626 = scalar_lea.vmem [#allocation11], %s1625
        // Predicated region
        $region61: #{tpu_custom_call.1} parent=35 // pred_check
          %p1627 = pneg %p161
        $region62: #{tpu_custom_call.1} parent=35 // pred_check_branch
          %1629 = sbr.rel (%p1627) target = $region64
        $region63: #{tpu_custom_call.1} parent=35 // pred_region
          %s1630 = smul.u32 32, %s31
          %s1632 = ssub.s32 4096, 4096
          %1633 = vsyncadd %s1623, %s1632
          %s1634 = smul.addr %s1630, 128
          %s1635 = scalar_lea.hbm %s4, %s1634
          %s1636 = sshll.u32 %s1626, 4
          %s1637 = int_to_ptr.vmem [resolvable:$true] %s1636
          %1642 = dma.vmem_to_hbm [thread:$0]  %s1637, 4096, %s1635, %s1623, 128, 128, 8
        $region64: #{tpu_custom_call.1} parent=35 // pred_fallthru
          _
      $region36: #{tpu_custom_call.1} parent=5 // pred_fallthru
        _
      %p1643 = scmp.le.s32.totalorder 2, %s22
      // Predicated region
      $region65: #{tpu_custom_call.1} parent=5 // pred_check
        %p1644 = pneg %p1643
      $region66: #{tpu_custom_call.1} parent=5 // pred_check_branch
        %1646 = sbr.rel (%p1644) target = $region68
      $region67: #{tpu_custom_call.1} parent=5 // pred_region
        %s1647 = ssub.s32 %s22, 2
        // Predicated region
        $region69: #{tpu_custom_call.1} parent=67 // pred_check
          %p1648 = pneg %p167
        $region70: #{tpu_custom_call.1} parent=67 // pred_check_branch
          %1650 = sbr.rel (%p1648) target = $region72
        $region71: #{tpu_custom_call.1} parent=67 // pred_region
          %s1651 = sand.u32 %s152, 1
          %s1652 = scalar_lea.sflag [#allocation5], %s1651
          %s1653 = sand.u32 %s152, 1
          %s1654 = smul.addr %s1653, 256
          %s1655 = scalar_lea.vmem [#allocation11], %s1654
          %1656 = dma.done %s1652, 4096
        $region72: #{tpu_custom_call.1} parent=67 // pred_fallthru
          _
      $region68: #{tpu_custom_call.1} parent=5 // pred_fallthru
        _
    $region6: #{tpu_custom_call.1} parent=1 // loop_footer
      %s26 = sadd.s32 1, %s22
    $region7: #{tpu_custom_call.1} parent=1 // loop_footer_branch
      %21 = sbr.rel target = $region3
    $region8: #{tpu_custom_call.1} parent=1 // loop_exit
      _
    %1657 = vsyncpa [#allocation4], 1
    %s1658 = scalar_lea.sflag [#allocation4], 1
    %1659 = vsyncpa %s1658, 1
    %1660 = vsyncpa [#allocation7], 1
    %s1661 = scalar_lea.sflag [#allocation7], 1
    %1662 = vsyncpa %s1661, 1
    %1663 = vsyncpa [#allocation10], 1
    %s1664 = scalar_lea.sflag [#allocation10], 1
    %1665 = vsyncpa %s1664, 1
    %1666 = vsyncpa [#allocation5], 1
    %s1667 = scalar_lea.sflag [#allocation5], 1
    %1668 = vsyncpa %s1667, 1

</llo_original>
